<compile_context>
chip_gen: v7x
topology: tpu7x:2x2x1
jax: 0.10.0
libtpu: 0.0.40
codegen_flags: <defaults>
</compile_context>

<pallas_src>
import functools

import jax
import jax.numpy as jnp
from jax import lax
from jax.experimental import pallas as pl
from jax.experimental.pallas import tpu as pltpu


# Explicit scoped-VMEM limit. 48 MiB leaves headroom on v7x (64 MiB physical)
# and is far below v5e/v6e (128 MiB); tiles below are sized well under it.
_VMEM_LIMIT = 48 * 1024 * 1024


def _round_up(n, m):
    return ((n + m - 1) // m) * m


# ----------------------------------------------------------------------------
# Shared per-tile attention math:
#   att = W2' @ relu(W1m' @ x + W1se' @ (g1 * group_sum(x)) + b1) + b2 + x
# group_sum is done as a matmul with the constant [I I I I] matrix (MXU,
# avoids sub-8 sublane slicing).  All matmuls accumulate in f32.
# ----------------------------------------------------------------------------
def _compute_att(x, gmat_ref, w1m_ref, w1se_ref, g1_ref, b1_ref, w2_ref, b2_ref):
    xf = x.astype(jnp.float32)                                        # (C, pt)
    x_mm = x.astype(w1m_ref.dtype)
    spx = jnp.dot(gmat_ref[...], x_mm, preferred_element_type=jnp.float32)  # (Cin, pt)
    spx_se = (spx * g1_ref[...]).astype(w1se_ref.dtype)               # SE1 gate
    z = (jnp.dot(w1m_ref[...], x_mm, preferred_element_type=jnp.float32)
         + jnp.dot(w1se_ref[...], spx_se, preferred_element_type=jnp.float32)
         + b1_ref[...])
    z = jnp.maximum(z, 0.0).astype(w2_ref.dtype)
    t = jnp.dot(w2_ref[...], z, preferred_element_type=jnp.float32) + b2_ref[...]
    return t + xf                                                     # f32 (C, pt)


# ----------------------------------------------------------------------------
# Pass 1a: pool only (input already in compute dtype / narrow enough)
# ----------------------------------------------------------------------------
def _pool_kernel(x_ref, psum_ref, *, p_valid, p_tile, need_mask):
    pj = pl.program_id(1)

    @pl.when(pj == 0)
    def _():
        psum_ref[...] = jnp.zeros_like(psum_ref)

    x = x_ref[...].astype(jnp.float32)
    if need_mask:  # last block overruns P: OOB lanes are garbage, zero them
        col = pj * p_tile + lax.broadcasted_iota(jnp.int32, x.shape, 1)
        x = jnp.where(col < p_valid, x, 0.0)
    psum_ref[...] += jnp.sum(x, axis=1, keepdims=True)


# ----------------------------------------------------------------------------
# Pass 1b: pool + fused pad/cast (emit x_p in compute dtype, zero-padded)
# ----------------------------------------------------------------------------
def _prep_kernel(x_ref, xp_ref, psum_ref, *, p_valid, p_tile, need_mask):
    pj = pl.program_id(1)

    @pl.when(pj == 0)
    def _():
        psum_ref[...] = jnp.zeros_like(psum_ref)

    x = x_ref[...].astype(jnp.float32)
    if need_mask:  # zero-fill padded lanes (keeps x_p pad region well-defined)
        col = pj * p_tile + lax.broadcasted_iota(jnp.int32, x.shape, 1)
        x = jnp.where(col < p_valid, x, 0.0)
    xp_ref[...] = x.astype(xp_ref.dtype)
    psum_ref[...] += jnp.sum(x, axis=1, keepdims=True)


# ----------------------------------------------------------------------------
# Pass 2: att channel sums only (no att HBM write); accumulated per batch
# ----------------------------------------------------------------------------
def _attsum_kernel(x_ref, gmat_ref, w1m_ref, w1se_ref, g1_ref, b1_ref,
                   w2_ref, b2_ref, psum_ref, *, p_valid, p_tile, need_mask):
    pj = pl.program_id(1)

    @pl.when(pj == 0)
    def _():
        psum_ref[...] = jnp.zeros_like(psum_ref)

    att = _compute_att(x_ref[...], gmat_ref, w1m_ref, w1se_ref, g1_ref,
                       b1_ref, w2_ref, b2_ref)

    if need_mask:
        is_last = pj == pl.num_programs(1) - 1

        @pl.when(is_last)  # mask padded lanes out of the SE2 pool (last tile only)
        def _():
            col = pj * p_tile + lax.broadcasted_iota(jnp.int32, att.shape, 1)
            psum_ref[...] += jnp.sum(jnp.where(col < p_valid, att, 0.0),
                                     axis=1, keepdims=True)

        @pl.when(jnp.logical_not(is_last))
        def _():
            psum_ref[...] += jnp.sum(att, axis=1, keepdims=True)
    else:
        psum_ref[...] += jnp.sum(att, axis=1, keepdims=True)


# ----------------------------------------------------------------------------
# Pass 3: recompute att, apply SE2 gate, write out (lane-dense store)
# ----------------------------------------------------------------------------
def _out_kernel(x_ref, gmat_ref, w1m_ref, w1se_ref, g1_ref, b1_ref,
                w2_ref, b2_ref, g2_ref, out_ref):
    att = _compute_att(x_ref[...], gmat_ref, w1m_ref, w1se_ref, g1_ref,
                       b1_ref, w2_ref, b2_ref)
    out_ref[...] = (att * g2_ref[...]).astype(out_ref.dtype)


# ----------------------------------------------------------------------------
# Wrapper: layout glue, constant folding, gate MLPs, three pallas_calls
# ----------------------------------------------------------------------------
@functools.partial(jax.jit, static_argnames=("p_tile", "compute_dtype"))
def attention_forward(x_nchw, params, *, p_tile=1024, compute_dtype=jnp.bfloat16):
    B, C, H, W = x_nchw.shape
    assert C % 4 == 0 and C >= 8, "Attention requires C % 4 == 0 and C >= 8"
    Cin = C // 4
    P = H * W
    dt = jnp.dtype(compute_dtype)

    # --- spatial tiling: lane-dense tiles (multiple of 128), rebalanced so the
    # padded extent P_pad = n_pt*pt over-runs P by < pt (and the last block
    # always starts inside x).
    P128 = _round_up(P, 128)
    pt0 = min(_round_up(p_tile, 128), P128)
    n_pt = pl.cdiv(P128, pt0)
    pt = _round_up(pl.cdiv(P128, n_pt), 128)
    P_pad = n_pt * pt
    need_mask = (P_pad != P)

    x = x_nchw.reshape(B, C, P)                       # free (metadata) reshape
    # Re-stream a narrow copy only when it saves bandwidth (e.g. f32 -> bf16).
    use_xp = jnp.dtype(x.dtype).itemsize > dt.itemsize

    cparams_red = pltpu.CompilerParams(               # p axis carries a reduction
        dimension_semantics=("parallel", "arbitrary"),
        vmem_limit_bytes=_VMEM_LIMIT)
    cparams_par = pltpu.CompilerParams(
        dimension_semantics=("parallel", "parallel"),
        vmem_limit_bytes=_VMEM_LIMIT)

    # ------------------------------------------------------------------ pass 1
    if use_xp:
        kern1 = functools.partial(_prep_kernel, p_valid=P, p_tile=pt,
                                  need_mask=need_mask)
        x_src, x_sum3 = pl.pallas_call(
            kern1,
            out_shape=(jax.ShapeDtypeStruct((B, C, P_pad), dt),
                       jax.ShapeDtypeStruct((B, C, 1), jnp.float32)),
            grid_spec=pltpu.PrefetchScalarGridSpec(
                num_scalar_prefetch=0,
                grid=(B, n_pt),
                in_specs=[pl.BlockSpec((None, C, pt), lambda b, p: (b, 0, p))],
                out_specs=(pl.BlockSpec((None, C, pt), lambda b, p: (b, 0, p)),
                           pl.BlockSpec((None, C, 1), lambda b, p: (b, 0, 0)))),
            compiler_params=cparams_red,
        )(x)
    else:
        kern1 = functools.partial(_pool_kernel, p_valid=P, p_tile=pt,
                                  need_mask=need_mask)
        x_sum3 = pl.pallas_call(
            kern1,
            out_shape=jax.ShapeDtypeStruct((B, C, 1), jnp.float32),
            grid_spec=pltpu.PrefetchScalarGridSpec(
                num_scalar_prefetch=0,
                grid=(B, n_pt),
                in_specs=[pl.BlockSpec((None, C, pt), lambda b, p: (b, 0, p))],
                out_specs=pl.BlockSpec((None, C, 1), lambda b, p: (b, 0, 0))),
            compiler_params=cparams_red,
        )(x)
        x_src = x   # passes 2/3 read x directly (partial last blocks handled)

    # ------------------------------------------------------ SE1 gate (tiny JAX)
    x_sum = x_sum3[:, :, 0]                                            # (B, C)
    spx_mean = x_sum.reshape(B, 4, Cin).sum(axis=1) / float(P)         # (B, Cin)
    h1 = jax.nn.relu(spx_mean @ params["se_w1"].T)                     # (B, Cin//2)
    g1 = jax.nn.sigmoid(h1 @ params["se_w2"].T)                        # (B, Cin)
    g1_col = g1[:, :, None].astype(jnp.float32)                        # (B, Cin, 1)

    # -------------------- fold DAG mix + BN1/BN2 scales (all batch-invariant)
    cb_w1 = params["cb_w1"]                                            # (C, 5*Cin)
    blk = [cb_w1[:, i * Cin:(i + 1) * Cin] for i in range(4)]
    # skip-connect DAG: column block j = sum_i Mix[i][j] * blk[i] (exact ints)
    mix_cols = [
        blk[0] + blk[1] + 2.0 * blk[2] + 4.0 * blk[3],
        blk[1] + blk[2] + 2.0 * blk[3],
        blk[2] + blk[3],
        blk[3],
    ]
    bn1_s, bn1_b = params["bn1_scale"], params["bn1_bias"]             # (C, 1)
    bn2_s, bn2_b = params["bn2_scale"], params["bn2_bias"]
    w1_main = (jnp.concatenate(mix_cols, axis=1) * bn1_s).astype(dt)   # (C, C)
    w1_se = (cb_w1[:, 4 * Cin:] * bn1_s).astype(dt)                    # (C, Cin)
    w2_full = (params["cb_w2"] * bn2_s).astype(dt)                     # (C, C)
    b1 = bn1_b.astype(jnp.float32)                                     # (C, 1)
    b2 = bn2_b.astype(jnp.float32)
    gmat = jnp.tile(jnp.eye(Cin, dtype=jnp.float32), (1, 4)).astype(dt)  # (Cin, C)

    weight_specs = [
        pl.BlockSpec((Cin, C), lambda b, p: (0, 0)),                   # gmat
        pl.BlockSpec((C, C), lambda b, p: (0, 0)),                     # W1m'
        pl.BlockSpec((C, Cin), lambda b, p: (0, 0)),                   # W1se'
        pl.BlockSpec((None, Cin, 1), lambda b, p: (b, 0, 0)),          # g1
        pl.BlockSpec((C, 1), lambda b, p: (0, 0)),                     # b1
        pl.BlockSpec((C, C), lambda b, p: (0, 0)),                     # W2'
        pl.BlockSpec((C, 1), lambda b, p: (0, 0)),                     # b2
    ]
    x_spec = pl.BlockSpec((None, C, pt), lambda b, p: (b, 0, p))

    # ------------------------------------------------------------------ pass 2
    kern2 = functools.partial(_attsum_kernel, p_valid=P, p_tile=pt,
                              need_mask=need_mask)
    att_sum3 = pl.pallas_call(
        kern2,
        out_shape=jax.ShapeDtypeStruct((B, C, 1), jnp.float32),
        grid_spec=pltpu.PrefetchScalarGridSpec(
            num_scalar_prefetch=0,
            grid=(B, n_pt),
            in_specs=[x_spec] + weight_specs,
            out_specs=pl.BlockSpec((None, C, 1), lambda b, p: (b, 0, 0))),
        compiler_params=cparams_red,
    )(x_src, gmat, w1_main, w1_se, g1_col, b1, w2_full, b2)

    # ------------------------------------------------------ SE2 gate (tiny JAX)
    att_mean = att_sum3[:, :, 0] / float(P)                            # (B, C)
    h2 = jax.nn.relu(att_mean @ params["se2_w1"].T)                    # (B, C//2)
    g2 = jax.nn.sigmoid(h2 @ params["se2_w2"].T)                       # (B, C)
    g2_col = g2[:, :, None].astype(jnp.float32)                        # (B, C, 1)

    # ------------------------------------------------------------------ pass 3
    out = pl.pallas_call(
        _out_kernel,
        out_shape=jax.ShapeDtypeStruct((B, C, P), dt),
        grid_spec=pltpu.PrefetchScalarGridSpec(
            num_scalar_prefetch=0,
            grid=(B, n_pt),
            in_specs=[x_spec] + weight_specs
                     + [pl.BlockSpec((None, C, 1), lambda b, p: (b, 0, 0))],  # g2
            out_specs=pl.BlockSpec((None, C, pt), lambda b, p: (b, 0, p))),
        compiler_params=cparams_par,
    )(x_src, gmat, w1_main, w1_se, g1_col, b1, w2_full, b2, g2_col)

    return out.reshape(B, C, H, W)


# ----------------------------------------------------------------------------
# Deterministic parameter construction (shapes per module __init__)
# ----------------------------------------------------------------------------
def make_params(key, C):
    Cin = C // 4
    eps = 1e-5
    ks = jax.random.split(key, 12)

    def rnd(k, shape, scale=0.1):
        return (scale * jax.random.normal(k, shape)).astype(jnp.float32)

    # SE(C_in, reduction=2): Linear(Cin, Cin//2), Linear(Cin//2, Cin), no bias
    se_w1 = rnd(ks[0], (Cin // 2, Cin))
    se_w2 = rnd(ks[1], (Cin, Cin // 2))
    # channel_back conv weights (1x1, bias=False)
    cb_w1 = rnd(ks[2], (C, 5 * Cin))
    cb_w2 = rnd(ks[3], (C, C))
    # BN params (eval mode), folded to scale/bias
    g1 = 1.0 + rnd(ks[4], (C,))
    b1 = rnd(ks[5], (C,))
    m1 = rnd(ks[6], (C,))
    v1 = jnp.abs(rnd(ks[7], (C,))) + 1.0
    g2 = 1.0 + rnd(ks[8], (C,))
    b2 = rnd(ks[9], (C,))
    m2 = rnd(ks[10], (C,))
    v2 = jnp.abs(rnd(ks[11], (C,))) + 1.0
    bn1_scale = (g1 / jnp.sqrt(v1 + eps)).reshape(C, 1)
    bn1_bias = (b1 - m1 * g1 / jnp.sqrt(v1 + eps)).reshape(C, 1)
    bn2_scale = (g2 / jnp.sqrt(v2 + eps)).reshape(C, 1)
    bn2_bias = (b2 - m2 * g2 / jnp.sqrt(v2 + eps)).reshape(C, 1)
    # SE2(C, reduction=2)
    k2 = jax.random.split(ks[0], 3)
    se2_w1 = rnd(k2[1], (C // 2, C))
    se2_w2 = rnd(k2[2], (C, C // 2))

    return dict(se_w1=se_w1, se_w2=se_w2,
                cb_w1=cb_w1, bn1_scale=bn1_scale, bn1_bias=bn1_bias,
                cb_w2=cb_w2, bn2_scale=bn2_scale, bn2_bias=bn2_bias,
                se2_w1=se2_w1, se2_w2=se2_w2)


# ----------------------------------------------------------------------------
# Pure-JAX reference (original, unfolded module semantics) for correctness
# ----------------------------------------------------------------------------
def attention_reference(x_nchw, p):
    B, C, H, W = x_nchw.shape
    P = H * W
    Cin = C // 4
    x = x_nchw.reshape(B, C, P).astype(jnp.float32)

    sp = [x[:, i * Cin:(i + 1) * Cin, :] for i in range(4)]
    spx_sum = sp[0] + sp[1] + sp[2] + sp[3]
    y = jnp.mean(spx_sum, axis=2, keepdims=True)                       # (B, Cin, 1)
    h = jnp.maximum(jnp.einsum("oc,bci->boi", p["se_w1"], y), 0.0)
    g = jax.nn.sigmoid(jnp.einsum("oc,bci->boi", p["se_w2"], h))
    spx_sum_se = spx_sum * g

    s1 = sp[0]
    s2 = sp[1] + s1
    s3 = sp[2] + s1 + s2
    s4 = sp[3] + s1 + s2 + s3
    nc = jnp.concatenate([s1, s2, s3, s4, spx_sum_se], axis=1)

    t = jnp.einsum("oc,bcp->bop", p["cb_w1"], nc)
    t = t * p["bn1_scale"][None] + p["bn1_bias"][None]
    t = jnp.maximum(t, 0.0)
    t = jnp.einsum("oc,bcp->bop", p["cb_w2"], t)
    t = t * p["bn2_scale"][None] + p["bn2_bias"][None]
    att = t + x

    y2 = jnp.mean(att, axis=2, keepdims=True)
    h2 = jnp.maximum(jnp.einsum("oc,bci->boi", p["se2_w1"], y2), 0.0)
    g2 = jax.nn.sigmoid(jnp.einsum("oc,bci->boi", p["se2_w2"], h2))
    return (att * g2).reshape(B, C, H, W)


if __name__ == "__main__":
    key = jax.random.PRNGKey(0)
    kx, kp, kx2 = jax.random.split(key, 3)

    B, C, H, W = 2, 16, 16, 16          # C must be divisible by 4 (width=4)
    x = jax.random.normal(kx, (B, C, H, W), dtype=jnp.float32)
    params = make_params(kp, C)
    ref = attention_reference(x, params)

    # f32 compute, multi-tile spatial (P=256 -> two 128-lane tiles), no x_p copy
    out = jax.block_until_ready(
        attention_forward(x, params, p_tile=128, compute_dtype=jnp.float32))
    assert out.shape == (B, C, H, W)
    assert jnp.allclose(out.astype(jnp.float32), ref, rtol=1e-3, atol=1e-3), \
        "f32 mismatch vs reference"

    # f32 compute, H*W not a multiple of 128 -> exercises partial blocks,
    # masked pooling, and dropped OOB output writes
    x2 = jax.random.normal(kx2, (1, C, 13, 13), dtype=jnp.float32)
    out2 = jax.block_until_ready(
        attention_forward(x2, params, p_tile=128, compute_dtype=jnp.float32))
    ref2 = attention_reference(x2, params)
    assert out2.shape == (1, C, 13, 13)
    assert jnp.allclose(out2.astype(jnp.float32), ref2, rtol=1e-3, atol=1e-3), \
        "f32 (padded) mismatch vs reference"

    # bf16 I/O + MXU operands (f32 accumulation); exercises the fused cast
    # into pass 1 (x_p emission)
    out_bf16 = jax.block_until_ready(
        attention_forward(x, params, p_tile=128, compute_dtype=jnp.bfloat16))
    assert jnp.allclose(out_bf16.astype(jnp.float32), ref, rtol=5e-2, atol=5e-2), \
        "bf16 mismatch vs reference"

    # default settings (bf16 compute, p_tile=1024 -> single 256-lane tile)
    out_def = jax.block_until_ready(attention_forward(x, params))
    assert jnp.allclose(out_def.astype(jnp.float32), ref, rtol=5e-2, atol=5e-2), \
        "default (bf16) mismatch vs reference"

    print("KERNEL_OK")
</pallas_src>

<mosaic_0001>
module attributes {stable_mosaic.version = 11 : i64} {
  func.func @_pool_kernel(%arg0: i32, %arg1: i32, %arg2: memref<1x16x128xf32, #tpu.memory_space<vmem>>, %arg3: memref<1x16x1xf32, #tpu.memory_space<vmem>>) attributes {dimension_semantics = [#tpu.dimension_semantics<parallel>, #tpu.dimension_semantics<arbitrary>], iteration_bounds = array<i64: 2, 2>, scalar_prefetch = 0 : i64, scratch_operands = 0 : i64, tpu.core_type = #tpu.core_type<tc>, window_params = [{transform_indices = @transform_0, window_bounds = array<i64: 1, 16, 128>}, {transform_indices = @transform_1, window_bounds = array<i64: 1, 16, 1>}]} {
    %c0_i32 = arith.constant 0 : i32
    %0 = arith.cmpi eq, %arg1, %c0_i32 : i32
    %1 = arith.extui %0 : i1 to i32
    %c0_i32_0 = arith.constant 0 : i32
    %2 = arith.cmpi ne, %1, %c0_i32_0 : i32
    scf.if %2 {
      %cst_9 = arith.constant 0.000000e+00 : f32
      %13 = vector.broadcast %cst_9 : f32 to vector<16x1xf32>
      %c0_10 = arith.constant 0 : index
      %c0_11 = arith.constant 0 : index
      %c0_12 = arith.constant 0 : index
      %14 = vector.load %arg3[%c0_10, %c0_11, %c0_12] : memref<1x16x1xf32, #tpu.memory_space<vmem>>, vector<1x16x1xf32>
      %15 = vector.shape_cast %14 : vector<1x16x1xf32> to vector<16x1xf32>
      %16 = vector.shape_cast %13 : vector<16x1xf32> to vector<1x16x1xf32>
      tpu.vector_store %arg3[%c0_10, %c0_11, %c0_12], %16 {strides = array<i32>} : memref<1x16x1xf32, #tpu.memory_space<vmem>>, vector<1x16x1xf32>,
    } else {
    }
    %c0 = arith.constant 0 : index
    %c0_1 = arith.constant 0 : index
    %c0_2 = arith.constant 0 : index
    %3 = vector.load %arg2[%c0, %c0_1, %c0_2] : memref<1x16x128xf32, #tpu.memory_space<vmem>>, vector<1x16x128xf32>
    %4 = vector.shape_cast %3 : vector<1x16x128xf32> to vector<16x128xf32>
    %c0_3 = arith.constant 0 : index
    %c0_4 = arith.constant 0 : index
    %c0_5 = arith.constant 0 : index
    %5 = vector.load %arg3[%c0_3, %c0_4, %c0_5] : memref<1x16x1xf32, #tpu.memory_space<vmem>>, vector<1x16x1xf32>
    %6 = vector.shape_cast %5 : vector<1x16x1xf32> to vector<16x1xf32>
    %cst = arith.constant dense<0.000000e+00> : vector<16xf32>
    %7 = vector.multi_reduction <add>, %4, %cst [1] : vector<16x128xf32> to vector<16xf32>
    %8 = vector.shape_cast %7 : vector<16xf32> to vector<16x1xf32>
    %9 = arith.addf %6, %8 : vector<16x1xf32>
    %c0_6 = arith.constant 0 : index
    %c0_7 = arith.constant 0 : index
    %c0_8 = arith.constant 0 : index
    %10 = vector.load %arg3[%c0_6, %c0_7, %c0_8] : memref<1x16x1xf32, #tpu.memory_space<vmem>>, vector<1x16x1xf32>
    %11 = vector.shape_cast %10 : vector<1x16x1xf32> to vector<16x1xf32>
    %12 = vector.shape_cast %9 : vector<16x1xf32> to vector<1x16x1xf32>
    tpu.vector_store %arg3[%c0_6, %c0_7, %c0_8], %12 {strides = array<i32>} : memref<1x16x1xf32, #tpu.memory_space<vmem>>, vector<1x16x1xf32>,
    return
  }
  func.func @transform_0(%arg0: i32, %arg1: i32) -> (i32, i32, i32) {
    %c0_i32 = arith.constant 0 : i32
    %c0_i32_0 = arith.constant 0 : i32
    return %arg0, %c0_i32, %arg1 : i32, i32, i32
  }
  func.func @transform_1(%arg0: i32, %arg1: i32) -> (i32, i32, i32) {
    %c0_i32 = arith.constant 0 : i32
    %c0_i32_0 = arith.constant 0 : i32
    %c0_i32_1 = arith.constant 0 : i32
    return %arg0, %c0_i32, %c0_i32_0 : i32, i32, i32
  }
}

module attributes {stable_mosaic.version = 11 : i64} {
  func.func @_attsum_kernel(%arg0: i32, %arg1: i32, %arg2: memref<1x16x128xf32, #tpu.memory_space<vmem>>, %arg3: memref<4x16xf32, #tpu.memory_space<vmem>>, %arg4: memref<16x16xf32, #tpu.memory_space<vmem>>, %arg5: memref<16x4xf32, #tpu.memory_space<vmem>>, %arg6: memref<1x4x1xf32, #tpu.memory_space<vmem>>, %arg7: memref<16x1xf32, #tpu.memory_space<vmem>>, %arg8: memref<16x16xf32, #tpu.memory_space<vmem>>, %arg9: memref<16x1xf32, #tpu.memory_space<vmem>>, %arg10: memref<1x16x1xf32, #tpu.memory_space<vmem>>) attributes {dimension_semantics = [#tpu.dimension_semantics<parallel>, #tpu.dimension_semantics<arbitrary>], iteration_bounds = array<i64: 2, 2>, scalar_prefetch = 0 : i64, scratch_operands = 0 : i64, tpu.core_type = #tpu.core_type<tc>, window_params = [{transform_indices = @transform_0, window_bounds = array<i64: 1, 16, 128>}, {pipeline_mode = #tpu.pipeline_mode<synchronous>, transform_indices = @transform_1, window_bounds = array<i64: 4, 16>}, {pipeline_mode = #tpu.pipeline_mode<synchronous>, transform_indices = @transform_2, window_bounds = array<i64: 16, 16>}, {pipeline_mode = #tpu.pipeline_mode<synchronous>, transform_indices = @transform_3, window_bounds = array<i64: 16, 4>}, {transform_indices = @transform_4, window_bounds = array<i64: 1, 4, 1>}, {pipeline_mode = #tpu.pipeline_mode<synchronous>, transform_indices = @transform_5, window_bounds = array<i64: 16, 1>}, {pipeline_mode = #tpu.pipeline_mode<synchronous>, transform_indices = @transform_6, window_bounds = array<i64: 16, 16>}, {pipeline_mode = #tpu.pipeline_mode<synchronous>, transform_indices = @transform_7, window_bounds = array<i64: 16, 1>}, {transform_indices = @transform_8, window_bounds = array<i64: 1, 16, 1>}]} {
    %c0_i32 = arith.constant 0 : i32
    %0 = arith.cmpi eq, %arg1, %c0_i32 : i32
    %1 = arith.extui %0 : i1 to i32
    %c0_i32_0 = arith.constant 0 : i32
    %2 = arith.cmpi ne, %1, %c0_i32_0 : i32
    scf.if %2 {
      %cst_29 = arith.constant 0.000000e+00 : f32
      %35 = vector.broadcast %cst_29 : f32 to vector<16x1xf32>
      %c0_30 = arith.constant 0 : index
      %c0_31 = arith.constant 0 : index
      %c0_32 = arith.constant 0 : index
      %36 = vector.load %arg10[%c0_30, %c0_31, %c0_32] : memref<1x16x1xf32, #tpu.memory_space<vmem>>, vector<1x16x1xf32>
      %37 = vector.shape_cast %36 : vector<1x16x1xf32> to vector<16x1xf32>
      %38 = vector.shape_cast %35 : vector<16x1xf32> to vector<1x16x1xf32>
      tpu.vector_store %arg10[%c0_30, %c0_31, %c0_32], %38 {strides = array<i32>} : memref<1x16x1xf32, #tpu.memory_space<vmem>>, vector<1x16x1xf32>,
    } else {
    }
    %c0 = arith.constant 0 : index
    %c0_1 = arith.constant 0 : index
    %c0_2 = arith.constant 0 : index
    %3 = vector.load %arg2[%c0, %c0_1, %c0_2] : memref<1x16x128xf32, #tpu.memory_space<vmem>>, vector<1x16x128xf32>
    %4 = vector.shape_cast %3 : vector<1x16x128xf32> to vector<16x128xf32>
    %c0_3 = arith.constant 0 : index
    %c0_4 = arith.constant 0 : index
    %5 = vector.load %arg3[%c0_3, %c0_4] : memref<4x16xf32, #tpu.memory_space<vmem>>, vector<4x16xf32>
    %cst = arith.constant dense<0.000000e+00> : vector<4x128xf32>
    %6 = tpu.matmul %5, %4, %cst {dimension_numbers = #tpu.dot_dimension_numbers<[1], [0], [0], [1], [0, 0, 1, 1], [], []>} : vector<4x16xf32>, vector<16x128xf32>, vector<4x128xf32> -> vector<4x128xf32>
    %c0_5 = arith.constant 0 : index
    %c0_6 = arith.constant 0 : index
    %c0_7 = arith.constant 0 : index
    %7 = vector.load %arg6[%c0_5, %c0_6, %c0_7] : memref<1x4x1xf32, #tpu.memory_space<vmem>>, vector<1x4x1xf32>
    %8 = vector.shape_cast %7 : vector<1x4x1xf32> to vector<4x1xf32>
    %9 = vector.broadcast %8 : vector<4x1xf32> to vector<4x128xf32>
    %10 = arith.mulf %6, %9 : vector<4x128xf32>
    %c0_8 = arith.constant 0 : index
    %c0_9 = arith.constant 0 : index
    %11 = vector.load %arg4[%c0_8, %c0_9] : memref<16x16xf32, #tpu.memory_space<vmem>>, vector<16x16xf32>
    %cst_10 = arith.constant dense<0.000000e+00> : vector<16x128xf32>
    %12 = tpu.matmul %11, %4, %cst_10 {dimension_numbers = #tpu.dot_dimension_numbers<[1], [0], [0], [1], [0, 0, 1, 1], [], []>} : vector<16x16xf32>, vector<16x128xf32>, vector<16x128xf32> -> vector<16x128xf32>
    %c0_11 = arith.constant 0 : index
    %c0_12 = arith.constant 0 : index
    %13 = vector.load %arg5[%c0_11, %c0_12] : memref<16x4xf32, #tpu.memory_space<vmem>>, vector<16x4xf32>
    %cst_13 = arith.constant dense<0.000000e+00> : vector<16x128xf32>
    %14 = tpu.matmul %13, %10, %cst_13 {dimension_numbers = #tpu.dot_dimension_numbers<[1], [0], [0], [1], [0, 0, 1, 1], [], []>} : vector<16x4xf32>, vector<4x128xf32>, vector<16x128xf32> -> vector<16x128xf32>
    %15 = arith.addf %12, %14 : vector<16x128xf32>
    %c0_14 = arith.constant 0 : index
    %c0_15 = arith.constant 0 : index
    %16 = vector.load %arg7[%c0_14, %c0_15] : memref<16x1xf32, #tpu.memory_space<vmem>>, vector<16x1xf32>
    %17 = vector.broadcast %16 : vector<16x1xf32> to vector<16x128xf32>
    %18 = arith.addf %15, %17 : vector<16x128xf32>
    %cst_16 = arith.constant 0.000000e+00 : f32
    %19 = vector.broadcast %cst_16 : f32 to vector<16x128xf32>
    %20 = arith.maximumf %18, %19 : vector<16x128xf32>
    %c0_17 = arith.constant 0 : index
    %c0_18 = arith.constant 0 : index
    %21 = vector.load %arg8[%c0_17, %c0_18] : memref<16x16xf32, #tpu.memory_space<vmem>>, vector<16x16xf32>
    %cst_19 = arith.constant dense<0.000000e+00> : vector<16x128xf32>
    %22 = tpu.matmul %21, %20, %cst_19 {dimension_numbers = #tpu.dot_dimension_numbers<[1], [0], [0], [1], [0, 0, 1, 1], [], []>} : vector<16x16xf32>, vector<16x128xf32>, vector<16x128xf32> -> vector<16x128xf32>
    %c0_20 = arith.constant 0 : index
    %c0_21 = arith.constant 0 : index
    %23 = vector.load %arg9[%c0_20, %c0_21] : memref<16x1xf32, #tpu.memory_space<vmem>>, vector<16x1xf32>
    %24 = vector.broadcast %23 : vector<16x1xf32> to vector<16x128xf32>
    %25 = arith.addf %22, %24 : vector<16x128xf32>
    %26 = arith.addf %25, %4 : vector<16x128xf32>
    %c0_22 = arith.constant 0 : index
    %c0_23 = arith.constant 0 : index
    %c0_24 = arith.constant 0 : index
    %27 = vector.load %arg10[%c0_22, %c0_23, %c0_24] : memref<1x16x1xf32, #tpu.memory_space<vmem>>, vector<1x16x1xf32>
    %28 = vector.shape_cast %27 : vector<1x16x1xf32> to vector<16x1xf32>
    %cst_25 = arith.constant dense<0.000000e+00> : vector<16xf32>
    %29 = vector.multi_reduction <add>, %26, %cst_25 [1] : vector<16x128xf32> to vector<16xf32>
    %30 = vector.shape_cast %29 : vector<16xf32> to vector<16x1xf32>
    %31 = arith.addf %28, %30 : vector<16x1xf32>
    %c0_26 = arith.constant 0 : index
    %c0_27 = arith.constant 0 : index
    %c0_28 = arith.constant 0 : index
    %32 = vector.load %arg10[%c0_26, %c0_27, %c0_28] : memref<1x16x1xf32, #tpu.memory_space<vmem>>, vector<1x16x1xf32>
    %33 = vector.shape_cast %32 : vector<1x16x1xf32> to vector<16x1xf32>
    %34 = vector.shape_cast %31 : vector<16x1xf32> to vector<1x16x1xf32>
    tpu.vector_store %arg10[%c0_26, %c0_27, %c0_28], %34 {strides = array<i32>} : memref<1x16x1xf32, #tpu.memory_space<vmem>>, vector<1x16x1xf32>,
    return
  }
  func.func @transform_0(%arg0: i32, %arg1: i32) -> (i32, i32, i32) {
    %c0_i32 = arith.constant 0 : i32
    %c0_i32_0 = arith.constant 0 : i32
    return %arg0, %c0_i32, %arg1 : i32, i32, i32
  }
  func.func @transform_1(%arg0: i32, %arg1: i32) -> (i32, i32) {
    %c0_i32 = arith.constant 0 : i32
    %c0_i32_0 = arith.constant 0 : i32
    %c0_i32_1 = arith.constant 0 : i32
    return %c0_i32, %c0_i32_0 : i32, i32
  }
  func.func @transform_2(%arg0: i32, %arg1: i32) -> (i32, i32) {
    %c0_i32 = arith.constant 0 : i32
    %c0_i32_0 = arith.constant 0 : i32
    %c0_i32_1 = arith.constant 0 : i32
    return %c0_i32, %c0_i32_0 : i32, i32
  }
  func.func @transform_3(%arg0: i32, %arg1: i32) -> (i32, i32) {
    %c0_i32 = arith.constant 0 : i32
    %c0_i32_0 = arith.constant 0 : i32
    %c0_i32_1 = arith.constant 0 : i32
    return %c0_i32, %c0_i32_0 : i32, i32
  }
  func.func @transform_4(%arg0: i32, %arg1: i32) -> (i32, i32, i32) {
    %c0_i32 = arith.constant 0 : i32
    %c0_i32_0 = arith.constant 0 : i32
    %c0_i32_1 = arith.constant 0 : i32
    return %arg0, %c0_i32, %c0_i32_0 : i32, i32, i32
  }
  func.func @transform_5(%arg0: i32, %arg1: i32) -> (i32, i32) {
    %c0_i32 = arith.constant 0 : i32
    %c0_i32_0 = arith.constant 0 : i32
    %c0_i32_1 = arith.constant 0 : i32
    return %c0_i32, %c0_i32_0 : i32, i32
  }
  func.func @transform_6(%arg0: i32, %arg1: i32) -> (i32, i32) {
    %c0_i32 = arith.constant 0 : i32
    %c0_i32_0 = arith.constant 0 : i32
    %c0_i32_1 = arith.constant 0 : i32
    return %c0_i32, %c0_i32_0 : i32, i32
  }
  func.func @transform_7(%arg0: i32, %arg1: i32) -> (i32, i32) {
    %c0_i32 = arith.constant 0 : i32
    %c0_i32_0 = arith.constant 0 : i32
    %c0_i32_1 = arith.constant 0 : i32
    return %c0_i32, %c0_i32_0 : i32, i32
  }
  func.func @transform_8(%arg0: i32, %arg1: i32) -> (i32, i32, i32) {
    %c0_i32 = arith.constant 0 : i32
    %c0_i32_0 = arith.constant 0 : i32
    %c0_i32_1 = arith.constant 0 : i32
    return %arg0, %c0_i32, %c0_i32_0 : i32, i32, i32
  }
}

module attributes {stable_mosaic.version = 11 : i64} {
  func.func @_out_kernel(%arg0: i32, %arg1: i32, %arg2: memref<1x16x128xf32, #tpu.memory_space<vmem>>, %arg3: memref<4x16xf32, #tpu.memory_space<vmem>>, %arg4: memref<16x16xf32, #tpu.memory_space<vmem>>, %arg5: memref<16x4xf32, #tpu.memory_space<vmem>>, %arg6: memref<1x4x1xf32, #tpu.memory_space<vmem>>, %arg7: memref<16x1xf32, #tpu.memory_space<vmem>>, %arg8: memref<16x16xf32, #tpu.memory_space<vmem>>, %arg9: memref<16x1xf32, #tpu.memory_space<vmem>>, %arg10: memref<1x16x1xf32, #tpu.memory_space<vmem>>, %arg11: memref<1x16x128xf32, #tpu.memory_space<vmem>>) attributes {dimension_semantics = [#tpu.dimension_semantics<parallel>, #tpu.dimension_semantics<parallel>], iteration_bounds = array<i64: 2, 2>, scalar_prefetch = 0 : i64, scratch_operands = 0 : i64, tpu.core_type = #tpu.core_type<tc>, window_params = [{transform_indices = @transform_0, window_bounds = array<i64: 1, 16, 128>}, {pipeline_mode = #tpu.pipeline_mode<synchronous>, transform_indices = @transform_1, window_bounds = array<i64: 4, 16>}, {pipeline_mode = #tpu.pipeline_mode<synchronous>, transform_indices = @transform_2, window_bounds = array<i64: 16, 16>}, {pipeline_mode = #tpu.pipeline_mode<synchronous>, transform_indices = @transform_3, window_bounds = array<i64: 16, 4>}, {transform_indices = @transform_4, window_bounds = array<i64: 1, 4, 1>}, {pipeline_mode = #tpu.pipeline_mode<synchronous>, transform_indices = @transform_5, window_bounds = array<i64: 16, 1>}, {pipeline_mode = #tpu.pipeline_mode<synchronous>, transform_indices = @transform_6, window_bounds = array<i64: 16, 16>}, {pipeline_mode = #tpu.pipeline_mode<synchronous>, transform_indices = @transform_7, window_bounds = array<i64: 16, 1>}, {transform_indices = @transform_8, window_bounds = array<i64: 1, 16, 1>}, {transform_indices = @transform_9, window_bounds = array<i64: 1, 16, 128>}]} {
    %c0 = arith.constant 0 : index
    %c0_0 = arith.constant 0 : index
    %c0_1 = arith.constant 0 : index
    %0 = vector.load %arg2[%c0, %c0_0, %c0_1] : memref<1x16x128xf32, #tpu.memory_space<vmem>>, vector<1x16x128xf32>
    %1 = vector.shape_cast %0 : vector<1x16x128xf32> to vector<16x128xf32>
    %c0_2 = arith.constant 0 : index
    %c0_3 = arith.constant 0 : index
    %2 = vector.load %arg3[%c0_2, %c0_3] : memref<4x16xf32, #tpu.memory_space<vmem>>, vector<4x16xf32>
    %cst = arith.constant dense<0.000000e+00> : vector<4x128xf32>
    %3 = tpu.matmul %2, %1, %cst {dimension_numbers = #tpu.dot_dimension_numbers<[1], [0], [0], [1], [0, 0, 1, 1], [], []>} : vector<4x16xf32>, vector<16x128xf32>, vector<4x128xf32> -> vector<4x128xf32>
    %c0_4 = arith.constant 0 : index
    %c0_5 = arith.constant 0 : index
    %c0_6 = arith.constant 0 : index
    %4 = vector.load %arg6[%c0_4, %c0_5, %c0_6] : memref<1x4x1xf32, #tpu.memory_space<vmem>>, vector<1x4x1xf32>
    %5 = vector.shape_cast %4 : vector<1x4x1xf32> to vector<4x1xf32>
    %6 = vector.broadcast %5 : vector<4x1xf32> to vector<4x128xf32>
    %7 = arith.mulf %3, %6 : vector<4x128xf32>
    %c0_7 = arith.constant 0 : index
    %c0_8 = arith.constant 0 : index
    %8 = vector.load %arg4[%c0_7, %c0_8] : memref<16x16xf32, #tpu.memory_space<vmem>>, vector<16x16xf32>
    %cst_9 = arith.constant dense<0.000000e+00> : vector<16x128xf32>
    %9 = tpu.matmul %8, %1, %cst_9 {dimension_numbers = #tpu.dot_dimension_numbers<[1], [0], [0], [1], [0, 0, 1, 1], [], []>} : vector<16x16xf32>, vector<16x128xf32>, vector<16x128xf32> -> vector<16x128xf32>
    %c0_10 = arith.constant 0 : index
    %c0_11 = arith.constant 0 : index
    %10 = vector.load %arg5[%c0_10, %c0_11] : memref<16x4xf32, #tpu.memory_space<vmem>>, vector<16x4xf32>
    %cst_12 = arith.constant dense<0.000000e+00> : vector<16x128xf32>
    %11 = tpu.matmul %10, %7, %cst_12 {dimension_numbers = #tpu.dot_dimension_numbers<[1], [0], [0], [1], [0, 0, 1, 1], [], []>} : vector<16x4xf32>, vector<4x128xf32>, vector<16x128xf32> -> vector<16x128xf32>
    %12 = arith.addf %9, %11 : vector<16x128xf32>
    %c0_13 = arith.constant 0 : index
    %c0_14 = arith.constant 0 : index
    %13 = vector.load %arg7[%c0_13, %c0_14] : memref<16x1xf32, #tpu.memory_space<vmem>>, vector<16x1xf32>
    %14 = vector.broadcast %13 : vector<16x1xf32> to vector<16x128xf32>
    %15 = arith.addf %12, %14 : vector<16x128xf32>
    %cst_15 = arith.constant 0.000000e+00 : f32
    %16 = vector.broadcast %cst_15 : f32 to vector<16x128xf32>
    %17 = arith.maximumf %15, %16 : vector<16x128xf32>
    %c0_16 = arith.constant 0 : index
    %c0_17 = arith.constant 0 : index
    %18 = vector.load %arg8[%c0_16, %c0_17] : memref<16x16xf32, #tpu.memory_space<vmem>>, vector<16x16xf32>
    %cst_18 = arith.constant dense<0.000000e+00> : vector<16x128xf32>
    %19 = tpu.matmul %18, %17, %cst_18 {dimension_numbers = #tpu.dot_dimension_numbers<[1], [0], [0], [1], [0, 0, 1, 1], [], []>} : vector<16x16xf32>, vector<16x128xf32>, vector<16x128xf32> -> vector<16x128xf32>
    %c0_19 = arith.constant 0 : index
    %c0_20 = arith.constant 0 : index
    %20 = vector.load %arg9[%c0_19, %c0_20] : memref<16x1xf32, #tpu.memory_space<vmem>>, vector<16x1xf32>
    %21 = vector.broadcast %20 : vector<16x1xf32> to vector<16x128xf32>
    %22 = arith.addf %19, %21 : vector<16x128xf32>
    %23 = arith.addf %22, %1 : vector<16x128xf32>
    %c0_21 = arith.constant 0 : index
    %c0_22 = arith.constant 0 : index
    %c0_23 = arith.constant 0 : index
    %24 = vector.load %arg10[%c0_21, %c0_22, %c0_23] : memref<1x16x1xf32, #tpu.memory_space<vmem>>, vector<1x16x1xf32>
    %25 = vector.shape_cast %24 : vector<1x16x1xf32> to vector<16x1xf32>
    %26 = vector.broadcast %25 : vector<16x1xf32> to vector<16x128xf32>
    %27 = arith.mulf %23, %26 : vector<16x128xf32>
    %c0_24 = arith.constant 0 : index
    %c0_25 = arith.constant 0 : index
    %c0_26 = arith.constant 0 : index
    %28 = vector.load %arg11[%c0_24, %c0_25, %c0_26] : memref<1x16x128xf32, #tpu.memory_space<vmem>>, vector<1x16x128xf32>
    %29 = vector.shape_cast %28 : vector<1x16x128xf32> to vector<16x128xf32>
    %30 = vector.shape_cast %27 : vector<16x128xf32> to vector<1x16x128xf32>
    tpu.vector_store %arg11[%c0_24, %c0_25, %c0_26], %30 {strides = array<i32>} : memref<1x16x128xf32, #tpu.memory_space<vmem>>, vector<1x16x128xf32>,
    return
  }
  func.func @transform_0(%arg0: i32, %arg1: i32) -> (i32, i32, i32) {
    %c0_i32 = arith.constant 0 : i32
    %c0_i32_0 = arith.constant 0 : i32
    return %arg0, %c0_i32, %arg1 : i32, i32, i32
  }
  func.func @transform_1(%arg0: i32, %arg1: i32) -> (i32, i32) {
    %c0_i32 = arith.constant 0 : i32
    %c0_i32_0 = arith.constant 0 : i32
    %c0_i32_1 = arith.constant 0 : i32
    return %c0_i32, %c0_i32_0 : i32, i32
  }
  func.func @transform_2(%arg0: i32, %arg1: i32) -> (i32, i32) {
    %c0_i32 = arith.constant 0 : i32
    %c0_i32_0 = arith.constant 0 : i32
    %c0_i32_1 = arith.constant 0 : i32
    return %c0_i32, %c0_i32_0 : i32, i32
  }
  func.func @transform_3(%arg0: i32, %arg1: i32) -> (i32, i32) {
    %c0_i32 = arith.constant 0 : i32
    %c0_i32_0 = arith.constant 0 : i32
    %c0_i32_1 = arith.constant 0 : i32
    return %c0_i32, %c0_i32_0 : i32, i32
  }
  func.func @transform_4(%arg0: i32, %arg1: i32) -> (i32, i32, i32) {
    %c0_i32 = arith.constant 0 : i32
    %c0_i32_0 = arith.constant 0 : i32
    %c0_i32_1 = arith.constant 0 : i32
    return %arg0, %c0_i32, %c0_i32_0 : i32, i32, i32
  }
  func.func @transform_5(%arg0: i32, %arg1: i32) -> (i32, i32) {
    %c0_i32 = arith.constant 0 : i32
    %c0_i32_0 = arith.constant 0 : i32
    %c0_i32_1 = arith.constant 0 : i32
    return %c0_i32, %c0_i32_0 : i32, i32
  }
  func.func @transform_6(%arg0: i32, %arg1: i32) -> (i32, i32) {
    %c0_i32 = arith.constant 0 : i32
    %c0_i32_0 = arith.constant 0 : i32
    %c0_i32_1 = arith.constant 0 : i32
    return %c0_i32, %c0_i32_0 : i32, i32
  }
  func.func @transform_7(%arg0: i32, %arg1: i32) -> (i32, i32) {
    %c0_i32 = arith.constant 0 : i32
    %c0_i32_0 = arith.constant 0 : i32
    %c0_i32_1 = arith.constant 0 : i32
    return %c0_i32, %c0_i32_0 : i32, i32
  }
  func.func @transform_8(%arg0: i32, %arg1: i32) -> (i32, i32, i32) {
    %c0_i32 = arith.constant 0 : i32
    %c0_i32_0 = arith.constant 0 : i32
    %c0_i32_1 = arith.constant 0 : i32
    return %arg0, %c0_i32, %c0_i32_0 : i32, i32, i32
  }
  func.func @transform_9(%arg0: i32, %arg1: i32) -> (i32, i32, i32) {
    %c0_i32 = arith.constant 0 : i32
    %c0_i32_0 = arith.constant 0 : i32
    return %arg0, %c0_i32, %arg1 : i32, i32, i32
  }
}

</mosaic_0001>

<llo_original>
// kernel: tile.9
$region0: #{tile.9}
  %s0 = inlined_call_operand.vmem [shape: f32[4,4,4], index: 0, kind: input, shape index: {}]
  %s1 = inlined_call_operand.vmem [shape: f32[4,16], index: 1, kind: output, shape index: {}]
  $region1: #{tile.9} parent=0
    #allocation0 [shape = 'u8[4096]{0}', space=vmem, size = 0x1000, scoped, tag = 'scoped mem for output reshape']
    #allocation1 [shape = 'u8[16384]{0}', space=vmem, size = 0x4000, scoped, tag = 'scoped mem for input reshape']
    %s3 = sshllo.u32 0, 4
    %s4 = smul.addr 4, 3
    %s5 = scalar_lea.vmem %s0, %s4
    %v6 = vld [vmem:[%s5] sm:%s3]
    %s7 = scalar_lea.vmem [#allocation1], 24
    %8 = vst [vmem:[%s7] sm:%s3] %v6
    %s9 = smul.addr 4, 2
    %s10 = scalar_lea.vmem %s0, %s9
    %v11 = vld [vmem:[%s10] sm:%s3]
    %s12 = scalar_lea.vmem [#allocation1], 16
    %13 = vst [vmem:[%s12] sm:%s3] %v11
    %s14 = scalar_lea.vmem %s0, 4
    %v15 = vld [vmem:[%s14] sm:%s3]
    %s16 = scalar_lea.vmem [#allocation1], 8
    %17 = vst [vmem:[%s16] sm:%s3] %v15
    %v18 = vld [vmem:[%s0] sm:%s3]
    %19 = vst [vmem:[#allocation1] sm:%s3] %v18
    %v20 = vld [vmem:[#allocation1] ss:$8 sm:$0xf]
    %vm21 = vcmask 31744
    %22 = vst.msk [vmem:[#allocation0] sm:$0xf] %vm21, %v20
    %s23 = scalar_lea.vmem [#allocation1], 3
    %v24 = vld [vmem:[%s23] ss:$8 sm:$0xf]
    %25 = vrot.lane.b32.xlu0 %v24, 12
    %v26 = vpop.permute.xlu0 %25
    %vm27 = vcmask 130144
    %28 = vst.msk [vmem:[#allocation0] sm:$0xf] %vm27, %v26
    %s29 = scalar_lea.vmem [#allocation1], 2
    %v30 = vld [vmem:[%s29] ss:$8 sm:$0xf]
    %31 = vrot.lane.b32.xlu0 %v30, 8
    %v32 = vpop.permute.xlu0 %31
    %vm33 = vcmask 97344
    %34 = vst.msk [vmem:[#allocation0] sm:$0xf] %vm33, %v32
    %s35 = scalar_lea.vmem [#allocation1], 1
    %v36 = vld [vmem:[%s35] ss:$8 sm:$0xf]
    %37 = vrot.lane.b32.xlu0 %v36, 4
    %v38 = vpop.permute.xlu0 %37
    %vm39 = vcmask 64544
    %40 = vst.msk [vmem:[#allocation0] sm:$0xf] %vm39, %v38
    %s42 = sshllo.u32 0, 4
    %v44 = vld [vmem:[#allocation0] sm:%s42]
    %s45 = sshllo.u32 0, 4
    %46 = vst [vmem:[%s1] sm:%s45] %v44

// kernel: squeeze.2
$region0: #{squeeze.2}
  %s0 = inlined_call_operand.vmem [shape: f32[2,16], index: 0, kind: input, shape index: {}]
  %s1 = inlined_call_operand.vmem [shape: f32[2,4,4], index: 1, kind: output, shape index: {}]
  $region1: #{squeeze.2} parent=0
    #allocation0 [shape = 'u8[8192]{0}', space=vmem, size = 0x2000, scoped, tag = 'scoped mem for output reshape']
    #allocation1 [shape = 'u8[4096]{0}', space=vmem, size = 0x1000, scoped, tag = 'scoped mem for input reshape']
    %s3 = sshllo.u32 0, 2
    %v4 = vld [vmem:[%s0] sm:%s3]
    %5 = vst [vmem:[#allocation1] sm:%s3] %v4
    %v6 = vld [vmem:[#allocation1] sm:$0x3]
    %vm7 = vcmask 31744
    %8 = vst.msk [vmem:[#allocation0] ss:$8 sm:$0x3] %vm7, %v6
    %v9 = vld [vmem:[#allocation1] sm:$0x3]
    %10 = vrot.lane.b32.xlu0 %v9, 124
    %v11 = vpop.permute.xlu0 %10
    %vm12 = vcmask 31744
    %s13 = scalar_lea.vmem [#allocation0], 1
    %14 = vst.msk [vmem:[%s13] ss:$8 sm:$0x3] %vm12, %v11
    %v15 = vld [vmem:[#allocation1] sm:$0x3]
    %16 = vrot.lane.b32.xlu0 %v15, 120
    %v17 = vpop.permute.xlu0 %16
    %vm18 = vcmask 31744
    %s19 = scalar_lea.vmem [#allocation0], 2
    %20 = vst.msk [vmem:[%s19] ss:$8 sm:$0x3] %vm18, %v17
    %v21 = vld [vmem:[#allocation1] sm:$0x3]
    %22 = vrot.lane.b32.xlu0 %v21, 116
    %v23 = vpop.permute.xlu0 %22
    %vm24 = vcmask 31744
    %s25 = scalar_lea.vmem [#allocation0], 3
    %26 = vst.msk [vmem:[%s25] ss:$8 sm:$0x3] %vm24, %v23
    %s28 = sshllo.u32 0, 4
    %v30 = vld [vmem:[#allocation0] sm:%s28]
    %s31 = sshllo.u32 0, 4
    %32 = vst [vmem:[%s1] sm:%s31] %v30
    %s33 = scalar_lea.vmem [#allocation0], 8
    %v34 = vld [vmem:[%s33] sm:%s28]
    %s35 = sshllo.u32 0, 4
    %s36 = scalar_lea.vmem %s1, 4
    %37 = vst [vmem:[%s36] sm:%s35] %v34

// kernel: attention_forward.3
$region0: #{attention_forward.3}
  #allocation0 [shape = 'u32[]', space=smem, size = 0x4, offset = 0x4, fixed_abs, tag = 'smem constant byte address 0x4 - core index']
  #allocation1 [shape = 'u32[144,128]{1,0:T(1,128)}', space=vmem, size = 0x12000, scoped, tag = 'internal scratch']
  %s0 = inlined_call_operand.vmem [shape: f32[2,16,256], index: 0, kind: input, shape index: {}]
  %s1 = inlined_call_operand.vmem [shape: f32[2,16,1], index: 1, kind: output, shape index: {}]
  %s2 = sld [smem:[#allocation0]]
  $region79: #{attention_forward.3} parent=0
    _
  %s4 = ssub.s32 1, %s2
  %s5 = scalar_select 0, %s4, %s2
  $region1: #{attention_forward.3} parent=0
    #allocation2 [shape = 'u8[16384]{0}', space=vmem, size = 0x4000, scoped, tag = 'input window, operand 0']
    loop: start=0, step=1, limit=6
    $region2: #{attention_forward.3} parent=1 // loop_pre_header
      _
    $region3: #{attention_forward.3} parent=1 // loop_header
      %s7 = sphi 0, %s11
      %p8 = scmp.ge.s32.totalorder %s7, 6
      %s14 = sphi 0, %s26
      %s15 = sphi 0, %s22
      %s16 = sphi 0, %s14
      %s17 = sphi 0, %s15
      %s18 = sphi 0, %s16
      %s19 = sphi 0, %s17
      %s31 = sphi 0, %s33
      %s34 = sphi 0, %s31
      %s35 = sphi 0, %s34
      %s51 = sphi 0, %s35
      %s57 = sphi 0, %s59
      %s60 = sphi 0, %s57
      %s61 = sphi 0, %s60
      %s77 = sphi 0, %s61
    $region4: #{attention_forward.3} parent=1 // loop_header_branch
      %10 = sbr.rel (%p8) target = $region8
    $region5: #{attention_forward.3} parent=1 // loop_body
      %s12 = ssub.s32 %s7, 1
      %s13 = ssub.s32 %s7, 2
      %s20 = sadd.s32 1, %s15
      %p21 = scmp.ge.s32.totalorder %s20, 2
      %s22 = scalar_select %p21, 0, %s20
      %s23 = sadd.s32 1, %s14
      %s24 = scalar_select %p21, %s23, %s14
      %p25 = scmp.ge.s32.totalorder %s24, 2
      %s26 = scalar_select %p25, 0, %s24
      %s27 = ssub.s32 %s14, %s26
      %s28 = ssub.s32 %s15, %s22
      %s29 = sor.u32 %s27, %s28
      %p30 = scmp.eq.s32.totalorder %s29, 0
      %s32 = sadd.s32 %s31, 1
      %s33 = scalar_select %p30, %s31, %s32
      %p36 = pneg %p30
      %p37 = scmp.eq.s32.totalorder %s7, 3
      %p38 = por %p36, %p37
      %p39 = scmp.ne.s32.totalorder %s31, %s34
      %p40 = scmp.eq.s32.totalorder %s7, 0
      %p41 = por %p39, %p40
      %p42 = scmp.ne.s32.totalorder %s31, %s34
      %p43 = scmp.eq.s32.totalorder %s12, 3
      %p44 = por %p42, %p43
      %p45 = scmp.ne.s32.totalorder %s34, %s35
      %p46 = scmp.eq.s32.totalorder %s12, 0
      %p47 = por %p45, %p46
      %p48 = scmp.ne.s32.totalorder %s34, %s35
      %p49 = scmp.eq.s32.totalorder %s13, 3
      %p50 = por %p48, %p49
      %p52 = scmp.ne.s32.totalorder %s35, %s51
      %p53 = scmp.eq.s32.totalorder %s13, 0
      %p54 = por %p52, %p53
      %s55 = ssub.s32 %s14, %s26
      %p56 = scmp.eq.s32.totalorder %s55, 0
      %s58 = sadd.s32 %s57, 1
      %s59 = scalar_select %p56, %s57, %s58
      %p62 = pneg %p56
      %p63 = scmp.eq.s32.totalorder %s7, 3
      %p64 = por %p62, %p63
      %p65 = scmp.ne.s32.totalorder %s57, %s60
      %p66 = scmp.eq.s32.totalorder %s7, 0
      %p67 = por %p65, %p66
      %p68 = scmp.ne.s32.totalorder %s57, %s60
      %p69 = scmp.eq.s32.totalorder %s12, 3
      %p70 = por %p68, %p69
      %p71 = scmp.ne.s32.totalorder %s60, %s61
      %p72 = scmp.eq.s32.totalorder %s12, 0
      %p73 = por %p71, %p72
      %p74 = scmp.ne.s32.totalorder %s60, %s61
      %p75 = scmp.eq.s32.totalorder %s13, 3
      %p76 = por %p74, %p75
      %p78 = scmp.ne.s32.totalorder %s61, %s77
      %p79 = scmp.eq.s32.totalorder %s13, 0
      %p80 = por %p78, %p79
      %p81 = scmp.le.s32.totalorder 1, %s7
      %p82 = scmp.lt.s32.totalorder %s7, 5
      %p83 = pnand %p81, %p82
      %p84 = pneg %p83
      // Predicated region
      $region9: #{attention_forward.3} parent=5 // pred_check
        _
      $region10: #{attention_forward.3} parent=5 // pred_check_branch
        %86 = sbr.rel (%p83) target = $region12
      $region11: #{attention_forward.3} parent=5 // pred_region
        %s87 = ssub.s32 %s7, 1
      $region12: #{attention_forward.3} parent=5 // pred_fallthru
        _
      %p88 = scmp.lt.s32.totalorder %s7, 4
      // Predicated region
      $region13: #{attention_forward.3} parent=5 // pred_check
        %p89 = pneg %p88
      $region14: #{attention_forward.3} parent=5 // pred_check_branch
        %91 = sbr.rel (%p89) target = $region16
      $region15: #{attention_forward.3} parent=5 // pred_region
        // Predicated region
        $region17: #{attention_forward.3} parent=15 // pred_check
          %p92 = pneg %p41
        $region18: #{attention_forward.3} parent=15 // pred_check_branch
          %94 = sbr.rel (%p92) target = $region20
        $region19: #{attention_forward.3} parent=15 // pred_region
          %s95 = sand.u32 %s31, 1
          %s96 = sand.u32 %s31, 1
          %s97 = smul.addr %s96, 16
          %s98 = scalar_lea.vmem [#allocation2], %s97
          %s99 = smul.addr %s14, 4
          %s100 = sadd.s32 %s15, %s99
          %s101 = smul.addr %s100, 8
          %s102 = scalar_lea.vmem %s0, %s101
          // Predicated region
          $region21: #{attention_forward.3} parent=19 // pred_check
            _
          $region22: #{attention_forward.3} parent=19 // pred_check_branch
            %104 = sbr.rel (0) target = $region24
          $region23: #{attention_forward.3} parent=19 // pred_region
            // Predicated region
            $region25: #{attention_forward.3} parent=23 // pred_check
              _
            $region26: #{attention_forward.3} parent=23 // pred_check_branch
              %106 = sbr.rel (0) target = $region28
            $region27: #{attention_forward.3} parent=23 // pred_region
              // Predicated region
              $region40: #{attention_forward.3} parent=27 // pred_check
                _
              $region41: #{attention_forward.3} parent=27 // pred_check_branch
                %123 = sbr.rel (0) target = $region43
              $region42: #{attention_forward.3} parent=27 // pred_region
                loop: start=0, step=1, limit=1
                $region44: #{attention_forward.3} parent=42 // loop_pre_header
                  _
                $region45: #{attention_forward.3} parent=42 // loop_header
                  %s125 = sphi 0, %s129
                  %p126 = scmp.ge.s32.totalorder %s125, 1
                  %s130 = sphi %s102, %s102
                  %s131 = sphi %s98, %s98
                $region46: #{attention_forward.3} parent=42 // loop_header_branch
                  %128 = sbr.rel (%p126) target = $region50
                $region47: #{attention_forward.3} parent=42 // loop_body
                  %v132 = vld [vmem:[%s130] sm:$0xff]
                  %133 = vst [vmem:[%s131] sm:$0xff] %v132
                  %v134 = vld [vmem:[%s130 + $0x10] sm:$0xff]
                  %135 = vst [vmem:[%s131 + $0x8] sm:$0xff] %v134
                $region48: #{attention_forward.3} parent=42 // loop_footer
                  %s129 = sadd.s32 1, %s125
                $region49: #{attention_forward.3} parent=42 // loop_footer_branch
                  %124 = sbr.rel target = $region45
                $region50: #{attention_forward.3} parent=42 // loop_exit
                  _
              $region43: #{attention_forward.3} parent=27 // pred_fallthru
                _
              // Predicated region
              $region51: #{attention_forward.3} parent=27 // pred_check
                _
              $region52: #{attention_forward.3} parent=27 // pred_check_branch
                %137 = sbr.rel target = $region54
              $region53: #{attention_forward.3} parent=27 // pred_region
                _
              $region54: #{attention_forward.3} parent=27 // pred_fallthru
                _
            $region28: #{attention_forward.3} parent=23 // pred_fallthru
              _
            // Predicated region
            $region29: #{attention_forward.3} parent=23 // pred_check
              _
            $region30: #{attention_forward.3} parent=23 // pred_check_branch
              %108 = sbr.rel target = $region32
            $region31: #{attention_forward.3} parent=23 // pred_region
              loop: start=0, step=1, limit=1
              $region33: #{attention_forward.3} parent=31 // loop_pre_header
                _
              $region34: #{attention_forward.3} parent=31 // loop_header
                %s111 = sphi 0, %s115
                %p112 = scmp.ge.s32.totalorder %s111, 1
                %s116 = sphi %s102, %s102
                %s117 = sphi %s98, %s98
              $region35: #{attention_forward.3} parent=31 // loop_header_branch
                %114 = sbr.rel (%p112) target = $region39
              $region36: #{attention_forward.3} parent=31 // loop_body
                %v118 = vld [vmem:[%s116] sm:$0xff]
                %119 = vst [vmem:[%s117] sm:$0xff] %v118
                %v120 = vld [vmem:[%s116 + $0x10] sm:$0xff]
                %121 = vst [vmem:[%s117 + $0x8] sm:$0xff] %v120
              $region37: #{attention_forward.3} parent=31 // loop_footer
                %s115 = sadd.s32 1, %s111
              $region38: #{attention_forward.3} parent=31 // loop_footer_branch
                %110 = sbr.rel target = $region34
              $region39: #{attention_forward.3} parent=31 // loop_exit
                _
            $region32: #{attention_forward.3} parent=23 // pred_fallthru
              _
          $region24: #{attention_forward.3} parent=19 // pred_fallthru
            _
          %138 = vnop
        $region20: #{attention_forward.3} parent=15 // pred_fallthru
          _
      $region16: #{attention_forward.3} parent=5 // pred_fallthru
        _
      %p139 = scmp.le.s32.totalorder 1, %s7
      %p140 = scmp.lt.s32.totalorder %s7, 5
      %p141 = pnand %p139, %p140
      %p142 = pneg %p141
      // Predicated region
      $region55: #{attention_forward.3} parent=5 // pred_check
        _
      $region56: #{attention_forward.3} parent=5 // pred_check_branch
        %144 = sbr.rel (%p141) target = $region58
      $region57: #{attention_forward.3} parent=5 // pred_region
        %s145 = ssub.s32 %s7, 1
        %s146 = sand.u32 %s34, 1
        %s147 = sand.u32 %s34, 1
        %s148 = smul.addr %s147, 16
        %s149 = scalar_lea.vmem [#allocation2], %s148
        // Predicated region
        $region59: #{attention_forward.3} parent=57 // pred_check
          %p150 = pneg %p47
        $region60: #{attention_forward.3} parent=57 // pred_check_branch
          %152 = sbr.rel (%p150) target = $region62
        $region61: #{attention_forward.3} parent=57 // pred_region
          _
        $region62: #{attention_forward.3} parent=57 // pred_fallthru
          _
        %s153 = sand.u32 %s34, 1
        %s154 = sand.u32 %s34, 1
        %s155 = smul.addr %s154, 16
        %s156 = scalar_lea.vmem [#allocation2], %s155
        %p157 = pneg %p47
        %p158 = pneg %p44
        %p159 = pneg %p73
        %p160 = pneg %p70
        %p161 = scmp.lt.s32.totalorder %s16, 1
        %s162 = scalar_select %p161, %s16, 1
        %s163 = smul.addr %s162, 2
        %s164 = smul.addr %s163, 8
        %s165 = scalar_lea.vmem %s1, %s164
        %p166 = scmp.lt.s32.totalorder %s16, 1
        %s167 = scalar_select %p166, %s16, 1
        %s168 = smul.addr %s167, 2
        %s169 = smul.addr %s168, 8
        %s170 = scalar_lea.vmem %s1, %s169
        %p171 = scmp.eq.s32.totalorder %s17, 0
        // Predicated region
        $region63: #{attention_forward.3} parent=57 // pred_check
          %p172 = pneg %p171
        $region64: #{attention_forward.3} parent=57 // pred_check_branch
          %174 = sbr.rel (%p172) target = $region66
        $region65: #{attention_forward.3} parent=57 // pred_region
          %vm175 = vcmask 7168
          %176 = vst.msk [vmem:[%s170] sm:$0xff] %vm175, 0.0
          %177 = vst.msk [vmem:[%s170 + $0x8] sm:$0xff] %vm175, 0.0
        $region66: #{attention_forward.3} parent=57 // pred_fallthru
          _
        %v178 = vld [vmem:[%s149] sm:$0xff]
        %v179 = vld [vmem:[%s149 + $0x8] sm:$0xff]
        %v180 = vld [vmem:[%s170] sm:$0xff]
        %v181 = vld [vmem:[%s170 + $0x8] sm:$0xff]
        %182 = vadd.xlane.f32.xlu0 %v178
        %v183 = vpop.xlane.xlu0 %182
        %184 = vadd.xlane.f32.xlu0 %v179
        %v185 = vpop.xlane.xlu0 %184
        %v186 = vadd.f32 %v180, %v183
        %v187 = vadd.f32 %v181, %v185
        %vm188 = vcmask 7168
        %189 = vst.msk [vmem:[%s170] sm:$0xff] %vm188, %v186
        %190 = vst.msk [vmem:[%s170 + $0x8] sm:$0xff] %vm188, %v187
        %p191 = scmp.lt.s32.totalorder %s16, 1
        %s192 = scalar_select %p191, %s16, 1
        %s193 = smul.addr %s192, 2
        %s194 = smul.addr %s193, 8
        %s195 = scalar_lea.vmem %s1, %s194
        // Predicated region
        $region67: #{attention_forward.3} parent=57 // pred_check
          %p196 = pneg %p70
        $region68: #{attention_forward.3} parent=57 // pred_check_branch
          %198 = sbr.rel (%p196) target = $region70
        $region69: #{attention_forward.3} parent=57 // pred_region
          _
        $region70: #{attention_forward.3} parent=57 // pred_fallthru
          _
      $region58: #{attention_forward.3} parent=5 // pred_fallthru
        _
      %p199 = scmp.le.s32.totalorder 2, %s7
      // Predicated region
      $region71: #{attention_forward.3} parent=5 // pred_check
        %p200 = pneg %p199
      $region72: #{attention_forward.3} parent=5 // pred_check_branch
        %202 = sbr.rel (%p200) target = $region74
      $region73: #{attention_forward.3} parent=5 // pred_region
        %s203 = ssub.s32 %s7, 2
        // Predicated region
        $region75: #{attention_forward.3} parent=73 // pred_check
          %p204 = pneg %p76
        $region76: #{attention_forward.3} parent=73 // pred_check_branch
          %206 = sbr.rel (%p204) target = $region78
        $region77: #{attention_forward.3} parent=73 // pred_region
          %p207 = scmp.lt.s32.totalorder %s18, 1
          %s208 = scalar_select %p207, %s18, 1
          %s209 = smul.addr %s208, 2
          %s210 = smul.addr %s209, 8
          %s211 = scalar_lea.vmem %s1, %s210
        $region78: #{attention_forward.3} parent=73 // pred_fallthru
          _
      $region74: #{attention_forward.3} parent=5 // pred_fallthru
        _
    $region6: #{attention_forward.3} parent=1 // loop_footer
      %s11 = sadd.s32 1, %s7
    $region7: #{attention_forward.3} parent=1 // loop_footer_branch
      %6 = sbr.rel target = $region3
    $region8: #{attention_forward.3} parent=1 // loop_exit
      _

// kernel: attention_forward.4
$region0: #{attention_forward.4}
  #allocation0 [shape = 'u32[]', space=smem, size = 0x4, offset = 0x4, fixed_abs, tag = 'smem constant byte address 0x4 - core index']
  #allocation1 [shape = 'u32[144,128]{1,0:T(1,128)}', space=vmem, size = 0x12000, scoped, tag = 'internal scratch']
  %s0 = inlined_call_operand.vmem [shape: f32[2,16,256], index: 0, kind: input, shape index: {}]
  %s1 = inlined_call_operand.vmem [shape: f32[4,16], index: 1, kind: input, shape index: {}]
  %s2 = inlined_call_operand.vmem [shape: f32[16,16], index: 2, kind: input, shape index: {}]
  %s3 = inlined_call_operand.vmem [shape: f32[16,4], index: 3, kind: input, shape index: {}]
  %s4 = inlined_call_operand.vmem [shape: f32[2,4,1], index: 4, kind: input, shape index: {}]
  %s5 = inlined_call_operand.vmem [shape: f32[16,1], index: 5, kind: input, shape index: {}]
  %s6 = inlined_call_operand.vmem [shape: f32[16,16], index: 6, kind: input, shape index: {}]
  %s7 = inlined_call_operand.vmem [shape: f32[16,1], index: 7, kind: input, shape index: {}]
  %s8 = inlined_call_operand.vmem [shape: f32[2,16,1], index: 8, kind: output, shape index: {}]
  %s9 = sld [smem:[#allocation0]]
  $region107: #{attention_forward.4} parent=0
    _
  %s11 = ssub.s32 1, %s9
  %s12 = scalar_select 0, %s11, %s9
  $region1: #{attention_forward.4} parent=0
    #allocation2 [shape = 'u8[16384]{0}', space=vmem, size = 0x4000, scoped, tag = 'input window, operand 0']
    loop: start=0, step=1, limit=6
    $region2: #{attention_forward.4} parent=1 // loop_pre_header
      _
    $region3: #{attention_forward.4} parent=1 // loop_header
      %s14 = sphi 0, %s18
      %p15 = scmp.ge.s32.totalorder %s14, 6
      %s21 = sphi 0, %s33
      %s22 = sphi 0, %s29
      %s23 = sphi 0, %s21
      %s24 = sphi 0, %s22
      %s25 = sphi 0, %s23
      %s26 = sphi 0, %s24
      %s38 = sphi 0, %s40
      %s41 = sphi 0, %s38
      %s42 = sphi 0, %s41
      %s58 = sphi 0, %s42
      %s62 = sphi 0, %s62
      %s64 = sphi 0, %s62
      %s65 = sphi 0, %s64
      %s79 = sphi 0, %s65
      %s83 = sphi 0, %s83
      %s85 = sphi 0, %s83
      %s86 = sphi 0, %s85
      %s100 = sphi 0, %s86
      %s104 = sphi 0, %s104
      %s106 = sphi 0, %s104
      %s107 = sphi 0, %s106
      %s121 = sphi 0, %s107
      %s127 = sphi 0, %s129
      %s130 = sphi 0, %s127
      %s131 = sphi 0, %s130
      %s147 = sphi 0, %s131
      %s151 = sphi 0, %s151
      %s153 = sphi 0, %s151
      %s154 = sphi 0, %s153
      %s168 = sphi 0, %s154
      %s172 = sphi 0, %s172
      %s174 = sphi 0, %s172
      %s175 = sphi 0, %s174
      %s189 = sphi 0, %s175
      %s193 = sphi 0, %s193
      %s195 = sphi 0, %s193
      %s196 = sphi 0, %s195
      %s210 = sphi 0, %s196
      %s216 = sphi 0, %s218
      %s219 = sphi 0, %s216
      %s220 = sphi 0, %s219
      %s236 = sphi 0, %s220
    $region4: #{attention_forward.4} parent=1 // loop_header_branch
      %17 = sbr.rel (%p15) target = $region8
    $region5: #{attention_forward.4} parent=1 // loop_body
      %s19 = ssub.s32 %s14, 1
      %s20 = ssub.s32 %s14, 2
      %s27 = sadd.s32 1, %s22
      %p28 = scmp.ge.s32.totalorder %s27, 2
      %s29 = scalar_select %p28, 0, %s27
      %s30 = sadd.s32 1, %s21
      %s31 = scalar_select %p28, %s30, %s21
      %p32 = scmp.ge.s32.totalorder %s31, 2
      %s33 = scalar_select %p32, 0, %s31
      %s34 = ssub.s32 %s21, %s33
      %s35 = ssub.s32 %s22, %s29
      %s36 = sor.u32 %s34, %s35
      %p37 = scmp.eq.s32.totalorder %s36, 0
      %s39 = sadd.s32 %s38, 1
      %s40 = scalar_select %p37, %s38, %s39
      %p43 = pneg %p37
      %p44 = scmp.eq.s32.totalorder %s14, 3
      %p45 = por %p43, %p44
      %p46 = scmp.ne.s32.totalorder %s38, %s41
      %p47 = scmp.eq.s32.totalorder %s14, 0
      %p48 = por %p46, %p47
      %p49 = scmp.ne.s32.totalorder %s38, %s41
      %p50 = scmp.eq.s32.totalorder %s19, 3
      %p51 = por %p49, %p50
      %p52 = scmp.ne.s32.totalorder %s41, %s42
      %p53 = scmp.eq.s32.totalorder %s19, 0
      %p54 = por %p52, %p53
      %p55 = scmp.ne.s32.totalorder %s41, %s42
      %p56 = scmp.eq.s32.totalorder %s20, 3
      %p57 = por %p55, %p56
      %p59 = scmp.ne.s32.totalorder %s42, %s58
      %p60 = scmp.eq.s32.totalorder %s20, 0
      %p61 = por %p59, %p60
      %s63 = sadd.s32 %s62, 1
      %p66 = scmp.eq.s32.totalorder %s14, 3
      %p67 = scmp.ne.s32.totalorder %s62, %s64
      %p68 = scmp.eq.s32.totalorder %s14, 0
      %p69 = por %p67, %p68
      %p70 = scmp.ne.s32.totalorder %s62, %s64
      %p71 = scmp.eq.s32.totalorder %s19, 3
      %p72 = por %p70, %p71
      %p73 = scmp.ne.s32.totalorder %s64, %s65
      %p74 = scmp.eq.s32.totalorder %s19, 0
      %p75 = por %p73, %p74
      %p76 = scmp.ne.s32.totalorder %s64, %s65
      %p77 = scmp.eq.s32.totalorder %s20, 3
      %p78 = por %p76, %p77
      %p80 = scmp.ne.s32.totalorder %s65, %s79
      %p81 = scmp.eq.s32.totalorder %s20, 0
      %p82 = por %p80, %p81
      %s84 = sadd.s32 %s83, 1
      %p87 = scmp.eq.s32.totalorder %s14, 3
      %p88 = scmp.ne.s32.totalorder %s83, %s85
      %p89 = scmp.eq.s32.totalorder %s14, 0
      %p90 = por %p88, %p89
      %p91 = scmp.ne.s32.totalorder %s83, %s85
      %p92 = scmp.eq.s32.totalorder %s19, 3
      %p93 = por %p91, %p92
      %p94 = scmp.ne.s32.totalorder %s85, %s86
      %p95 = scmp.eq.s32.totalorder %s19, 0
      %p96 = por %p94, %p95
      %p97 = scmp.ne.s32.totalorder %s85, %s86
      %p98 = scmp.eq.s32.totalorder %s20, 3
      %p99 = por %p97, %p98
      %p101 = scmp.ne.s32.totalorder %s86, %s100
      %p102 = scmp.eq.s32.totalorder %s20, 0
      %p103 = por %p101, %p102
      %s105 = sadd.s32 %s104, 1
      %p108 = scmp.eq.s32.totalorder %s14, 3
      %p109 = scmp.ne.s32.totalorder %s104, %s106
      %p110 = scmp.eq.s32.totalorder %s14, 0
      %p111 = por %p109, %p110
      %p112 = scmp.ne.s32.totalorder %s104, %s106
      %p113 = scmp.eq.s32.totalorder %s19, 3
      %p114 = por %p112, %p113
      %p115 = scmp.ne.s32.totalorder %s106, %s107
      %p116 = scmp.eq.s32.totalorder %s19, 0
      %p117 = por %p115, %p116
      %p118 = scmp.ne.s32.totalorder %s106, %s107
      %p119 = scmp.eq.s32.totalorder %s20, 3
      %p120 = por %p118, %p119
      %p122 = scmp.ne.s32.totalorder %s107, %s121
      %p123 = scmp.eq.s32.totalorder %s20, 0
      %p124 = por %p122, %p123
      %s125 = ssub.s32 %s21, %s33
      %p126 = scmp.eq.s32.totalorder %s125, 0
      %s128 = sadd.s32 %s127, 1
      %s129 = scalar_select %p126, %s127, %s128
      %p132 = pneg %p126
      %p133 = scmp.eq.s32.totalorder %s14, 3
      %p134 = por %p132, %p133
      %p135 = scmp.ne.s32.totalorder %s127, %s130
      %p136 = scmp.eq.s32.totalorder %s14, 0
      %p137 = por %p135, %p136
      %p138 = scmp.ne.s32.totalorder %s127, %s130
      %p139 = scmp.eq.s32.totalorder %s19, 3
      %p140 = por %p138, %p139
      %p141 = scmp.ne.s32.totalorder %s130, %s131
      %p142 = scmp.eq.s32.totalorder %s19, 0
      %p143 = por %p141, %p142
      %p144 = scmp.ne.s32.totalorder %s130, %s131
      %p145 = scmp.eq.s32.totalorder %s20, 3
      %p146 = por %p144, %p145
      %p148 = scmp.ne.s32.totalorder %s131, %s147
      %p149 = scmp.eq.s32.totalorder %s20, 0
      %p150 = por %p148, %p149
      %s152 = sadd.s32 %s151, 1
      %p155 = scmp.eq.s32.totalorder %s14, 3
      %p156 = scmp.ne.s32.totalorder %s151, %s153
      %p157 = scmp.eq.s32.totalorder %s14, 0
      %p158 = por %p156, %p157
      %p159 = scmp.ne.s32.totalorder %s151, %s153
      %p160 = scmp.eq.s32.totalorder %s19, 3
      %p161 = por %p159, %p160
      %p162 = scmp.ne.s32.totalorder %s153, %s154
      %p163 = scmp.eq.s32.totalorder %s19, 0
      %p164 = por %p162, %p163
      %p165 = scmp.ne.s32.totalorder %s153, %s154
      %p166 = scmp.eq.s32.totalorder %s20, 3
      %p167 = por %p165, %p166
      %p169 = scmp.ne.s32.totalorder %s154, %s168
      %p170 = scmp.eq.s32.totalorder %s20, 0
      %p171 = por %p169, %p170
      %s173 = sadd.s32 %s172, 1
      %p176 = scmp.eq.s32.totalorder %s14, 3
      %p177 = scmp.ne.s32.totalorder %s172, %s174
      %p178 = scmp.eq.s32.totalorder %s14, 0
      %p179 = por %p177, %p178
      %p180 = scmp.ne.s32.totalorder %s172, %s174
      %p181 = scmp.eq.s32.totalorder %s19, 3
      %p182 = por %p180, %p181
      %p183 = scmp.ne.s32.totalorder %s174, %s175
      %p184 = scmp.eq.s32.totalorder %s19, 0
      %p185 = por %p183, %p184
      %p186 = scmp.ne.s32.totalorder %s174, %s175
      %p187 = scmp.eq.s32.totalorder %s20, 3
      %p188 = por %p186, %p187
      %p190 = scmp.ne.s32.totalorder %s175, %s189
      %p191 = scmp.eq.s32.totalorder %s20, 0
      %p192 = por %p190, %p191
      %s194 = sadd.s32 %s193, 1
      %p197 = scmp.eq.s32.totalorder %s14, 3
      %p198 = scmp.ne.s32.totalorder %s193, %s195
      %p199 = scmp.eq.s32.totalorder %s14, 0
      %p200 = por %p198, %p199
      %p201 = scmp.ne.s32.totalorder %s193, %s195
      %p202 = scmp.eq.s32.totalorder %s19, 3
      %p203 = por %p201, %p202
      %p204 = scmp.ne.s32.totalorder %s195, %s196
      %p205 = scmp.eq.s32.totalorder %s19, 0
      %p206 = por %p204, %p205
      %p207 = scmp.ne.s32.totalorder %s195, %s196
      %p208 = scmp.eq.s32.totalorder %s20, 3
      %p209 = por %p207, %p208
      %p211 = scmp.ne.s32.totalorder %s196, %s210
      %p212 = scmp.eq.s32.totalorder %s20, 0
      %p213 = por %p211, %p212
      %s214 = ssub.s32 %s21, %s33
      %p215 = scmp.eq.s32.totalorder %s214, 0
      %s217 = sadd.s32 %s216, 1
      %s218 = scalar_select %p215, %s216, %s217
      %p221 = pneg %p215
      %p222 = scmp.eq.s32.totalorder %s14, 3
      %p223 = por %p221, %p222
      %p224 = scmp.ne.s32.totalorder %s216, %s219
      %p225 = scmp.eq.s32.totalorder %s14, 0
      %p226 = por %p224, %p225
      %p227 = scmp.ne.s32.totalorder %s216, %s219
      %p228 = scmp.eq.s32.totalorder %s19, 3
      %p229 = por %p227, %p228
      %p230 = scmp.ne.s32.totalorder %s219, %s220
      %p231 = scmp.eq.s32.totalorder %s19, 0
      %p232 = por %p230, %p231
      %p233 = scmp.ne.s32.totalorder %s219, %s220
      %p234 = scmp.eq.s32.totalorder %s20, 3
      %p235 = por %p233, %p234
      %p237 = scmp.ne.s32.totalorder %s220, %s236
      %p238 = scmp.eq.s32.totalorder %s20, 0
      %p239 = por %p237, %p238
      %p240 = scmp.le.s32.totalorder 1, %s14
      %p241 = scmp.lt.s32.totalorder %s14, 5
      %p242 = pnand %p240, %p241
      %p243 = pneg %p242
      // Predicated region
      $region9: #{attention_forward.4} parent=5 // pred_check
        _
      $region10: #{attention_forward.4} parent=5 // pred_check_branch
        %245 = sbr.rel (%p242) target = $region12
      $region11: #{attention_forward.4} parent=5 // pred_region
        %s246 = ssub.s32 %s14, 1
        // Predicated region
        $region13: #{attention_forward.4} parent=11 // pred_check
          %p247 = pneg %p75
        $region14: #{attention_forward.4} parent=11 // pred_check_branch
          %249 = sbr.rel (%p247) target = $region16
        $region15: #{attention_forward.4} parent=11 // pred_region
          _
        $region16: #{attention_forward.4} parent=11 // pred_fallthru
          _
        // Predicated region
        $region17: #{attention_forward.4} parent=11 // pred_check
          %p250 = pneg %p96
        $region18: #{attention_forward.4} parent=11 // pred_check_branch
          %252 = sbr.rel (%p250) target = $region20
        $region19: #{attention_forward.4} parent=11 // pred_region
          _
        $region20: #{attention_forward.4} parent=11 // pred_fallthru
          _
        // Predicated region
        $region21: #{attention_forward.4} parent=11 // pred_check
          %p253 = pneg %p117
        $region22: #{attention_forward.4} parent=11 // pred_check_branch
          %255 = sbr.rel (%p253) target = $region24
        $region23: #{attention_forward.4} parent=11 // pred_region
          _
        $region24: #{attention_forward.4} parent=11 // pred_fallthru
          _
        // Predicated region
        $region25: #{attention_forward.4} parent=11 // pred_check
          %p256 = pneg %p164
        $region26: #{attention_forward.4} parent=11 // pred_check_branch
          %258 = sbr.rel (%p256) target = $region28
        $region27: #{attention_forward.4} parent=11 // pred_region
          _
        $region28: #{attention_forward.4} parent=11 // pred_fallthru
          _
        // Predicated region
        $region29: #{attention_forward.4} parent=11 // pred_check
          %p259 = pneg %p185
        $region30: #{attention_forward.4} parent=11 // pred_check_branch
          %261 = sbr.rel (%p259) target = $region32
        $region31: #{attention_forward.4} parent=11 // pred_region
          _
        $region32: #{attention_forward.4} parent=11 // pred_fallthru
          _
        // Predicated region
        $region33: #{attention_forward.4} parent=11 // pred_check
          %p262 = pneg %p206
        $region34: #{attention_forward.4} parent=11 // pred_check_branch
          %264 = sbr.rel (%p262) target = $region36
        $region35: #{attention_forward.4} parent=11 // pred_region
          _
        $region36: #{attention_forward.4} parent=11 // pred_fallthru
          _
      $region12: #{attention_forward.4} parent=5 // pred_fallthru
        _
      %p265 = scmp.lt.s32.totalorder %s14, 4
      // Predicated region
      $region37: #{attention_forward.4} parent=5 // pred_check
        %p266 = pneg %p265
      $region38: #{attention_forward.4} parent=5 // pred_check_branch
        %268 = sbr.rel (%p266) target = $region40
      $region39: #{attention_forward.4} parent=5 // pred_region
        // Predicated region
        $region41: #{attention_forward.4} parent=39 // pred_check
          %p269 = pneg %p48
        $region42: #{attention_forward.4} parent=39 // pred_check_branch
          %271 = sbr.rel (%p269) target = $region44
        $region43: #{attention_forward.4} parent=39 // pred_region
          %s272 = sand.u32 %s38, 1
          %s273 = sand.u32 %s38, 1
          %s274 = smul.addr %s273, 16
          %s275 = scalar_lea.vmem [#allocation2], %s274
          %s276 = smul.addr %s21, 4
          %s277 = sadd.s32 %s22, %s276
          %s278 = smul.addr %s277, 8
          %s279 = scalar_lea.vmem %s0, %s278
          // Predicated region
          $region45: #{attention_forward.4} parent=43 // pred_check
            _
          $region46: #{attention_forward.4} parent=43 // pred_check_branch
            %281 = sbr.rel (0) target = $region48
          $region47: #{attention_forward.4} parent=43 // pred_region
            // Predicated region
            $region49: #{attention_forward.4} parent=47 // pred_check
              _
            $region50: #{attention_forward.4} parent=47 // pred_check_branch
              %283 = sbr.rel (0) target = $region52
            $region51: #{attention_forward.4} parent=47 // pred_region
              // Predicated region
              $region64: #{attention_forward.4} parent=51 // pred_check
                _
              $region65: #{attention_forward.4} parent=51 // pred_check_branch
                %300 = sbr.rel (0) target = $region67
              $region66: #{attention_forward.4} parent=51 // pred_region
                loop: start=0, step=1, limit=1
                $region68: #{attention_forward.4} parent=66 // loop_pre_header
                  _
                $region69: #{attention_forward.4} parent=66 // loop_header
                  %s302 = sphi 0, %s306
                  %p303 = scmp.ge.s32.totalorder %s302, 1
                  %s307 = sphi %s279, %s279
                  %s308 = sphi %s275, %s275
                $region70: #{attention_forward.4} parent=66 // loop_header_branch
                  %305 = sbr.rel (%p303) target = $region74
                $region71: #{attention_forward.4} parent=66 // loop_body
                  %v309 = vld [vmem:[%s307] sm:$0xff]
                  %310 = vst [vmem:[%s308] sm:$0xff] %v309
                  %v311 = vld [vmem:[%s307 + $0x10] sm:$0xff]
                  %312 = vst [vmem:[%s308 + $0x8] sm:$0xff] %v311
                $region72: #{attention_forward.4} parent=66 // loop_footer
                  %s306 = sadd.s32 1, %s302
                $region73: #{attention_forward.4} parent=66 // loop_footer_branch
                  %301 = sbr.rel target = $region69
                $region74: #{attention_forward.4} parent=66 // loop_exit
                  _
              $region67: #{attention_forward.4} parent=51 // pred_fallthru
                _
              // Predicated region
              $region75: #{attention_forward.4} parent=51 // pred_check
                _
              $region76: #{attention_forward.4} parent=51 // pred_check_branch
                %314 = sbr.rel target = $region78
              $region77: #{attention_forward.4} parent=51 // pred_region
                _
              $region78: #{attention_forward.4} parent=51 // pred_fallthru
                _
            $region52: #{attention_forward.4} parent=47 // pred_fallthru
              _
            // Predicated region
            $region53: #{attention_forward.4} parent=47 // pred_check
              _
            $region54: #{attention_forward.4} parent=47 // pred_check_branch
              %285 = sbr.rel target = $region56
            $region55: #{attention_forward.4} parent=47 // pred_region
              loop: start=0, step=1, limit=1
              $region57: #{attention_forward.4} parent=55 // loop_pre_header
                _
              $region58: #{attention_forward.4} parent=55 // loop_header
                %s288 = sphi 0, %s292
                %p289 = scmp.ge.s32.totalorder %s288, 1
                %s293 = sphi %s279, %s279
                %s294 = sphi %s275, %s275
              $region59: #{attention_forward.4} parent=55 // loop_header_branch
                %291 = sbr.rel (%p289) target = $region63
              $region60: #{attention_forward.4} parent=55 // loop_body
                %v295 = vld [vmem:[%s293] sm:$0xff]
                %296 = vst [vmem:[%s294] sm:$0xff] %v295
                %v297 = vld [vmem:[%s293 + $0x10] sm:$0xff]
                %298 = vst [vmem:[%s294 + $0x8] sm:$0xff] %v297
              $region61: #{attention_forward.4} parent=55 // loop_footer
                %s292 = sadd.s32 1, %s288
              $region62: #{attention_forward.4} parent=55 // loop_footer_branch
                %287 = sbr.rel target = $region58
              $region63: #{attention_forward.4} parent=55 // loop_exit
                _
            $region56: #{attention_forward.4} parent=47 // pred_fallthru
              _
          $region48: #{attention_forward.4} parent=43 // pred_fallthru
            _
          %315 = vnop
        $region44: #{attention_forward.4} parent=39 // pred_fallthru
          _
        // Predicated region
        $region79: #{attention_forward.4} parent=39 // pred_check
          %p316 = pneg %p137
        $region80: #{attention_forward.4} parent=39 // pred_check_branch
          %318 = sbr.rel (%p316) target = $region82
        $region81: #{attention_forward.4} parent=39 // pred_region
          %p319 = scmp.lt.s32.totalorder %s21, 1
          %s320 = scalar_select %p319, %s21, 1
          %s321 = smul.addr %s320, 4
          %s322 = scalar_lea.vmem %s4, %s321
        $region82: #{attention_forward.4} parent=39 // pred_fallthru
          _
      $region40: #{attention_forward.4} parent=5 // pred_fallthru
        _
      %p323 = scmp.le.s32.totalorder 1, %s14
      %p324 = scmp.lt.s32.totalorder %s14, 5
      %p325 = pnand %p323, %p324
      %p326 = pneg %p325
      // Predicated region
      $region83: #{attention_forward.4} parent=5 // pred_check
        _
      $region84: #{attention_forward.4} parent=5 // pred_check_branch
        %328 = sbr.rel (%p325) target = $region86
      $region85: #{attention_forward.4} parent=5 // pred_region
        %s329 = ssub.s32 %s14, 1
        %s330 = sand.u32 %s41, 1
        %s331 = sand.u32 %s41, 1
        %s332 = smul.addr %s331, 16
        %s333 = scalar_lea.vmem [#allocation2], %s332
        // Predicated region
        $region87: #{attention_forward.4} parent=85 // pred_check
          %p334 = pneg %p54
        $region88: #{attention_forward.4} parent=85 // pred_check_branch
          %336 = sbr.rel (%p334) target = $region90
        $region89: #{attention_forward.4} parent=85 // pred_region
          _
        $region90: #{attention_forward.4} parent=85 // pred_fallthru
          _
        %s337 = sand.u32 %s41, 1
        %s338 = sand.u32 %s41, 1
        %s339 = smul.addr %s338, 16
        %s340 = scalar_lea.vmem [#allocation2], %s339
        %p341 = pneg %p54
        %p342 = pneg %p51
        %p343 = pneg %p75
        %p344 = pneg %p72
        %p345 = pneg %p96
        %p346 = pneg %p93
        %p347 = pneg %p117
        %p348 = pneg %p114
        %p349 = scmp.lt.s32.totalorder %s23, 1
        %s350 = scalar_select %p349, %s23, 1
        %s351 = smul.addr %s350, 4
        %s352 = scalar_lea.vmem %s4, %s351
        %p353 = pneg %p143
        %p354 = pneg %p140
        %p355 = pneg %p164
        %p356 = pneg %p161
        %p357 = pneg %p185
        %p358 = pneg %p182
        %p359 = pneg %p206
        %p360 = pneg %p203
        %p361 = pneg %p232
        %p362 = pneg %p229
        %p363 = scmp.lt.s32.totalorder %s23, 1
        %s364 = scalar_select %p363, %s23, 1
        %s365 = smul.addr %s364, 2
        %s366 = smul.addr %s365, 8
        %s367 = scalar_lea.vmem %s8, %s366
        %p368 = scmp.lt.s32.totalorder %s23, 1
        %s369 = scalar_select %p368, %s23, 1
        %s370 = smul.addr %s369, 4
        %s371 = scalar_lea.vmem %s4, %s370
        %p372 = scmp.lt.s32.totalorder %s23, 1
        %s373 = scalar_select %p372, %s23, 1
        %s374 = smul.addr %s373, 2
        %s375 = smul.addr %s374, 8
        %s376 = scalar_lea.vmem %s8, %s375
        %p377 = scmp.eq.s32.totalorder %s24, 0
        // Predicated region
        $region91: #{attention_forward.4} parent=85 // pred_check
          %p378 = pneg %p377
        $region92: #{attention_forward.4} parent=85 // pred_check_branch
          %380 = sbr.rel (%p378) target = $region94
        $region93: #{attention_forward.4} parent=85 // pred_region
          %vm381 = vcmask 7168
          %382 = vst.msk [vmem:[%s376] sm:$0xff] %vm381, 0.0
          %383 = vst.msk [vmem:[%s376 + $0x8] sm:$0xff] %vm381, 0.0
        $region94: #{attention_forward.4} parent=85 // pred_fallthru
          _
        %v384 = vld [vmem:[%s333] sm:$0xff]
        %v385 = vld [vmem:[%s333 + $0x8] sm:$0xff]
        %v386 = vld [vmem:[%s1] sm:$0xf]
        %vm387 = vcmask 130048
        %v389 = vsel %vm387, %v386, 0
        %391 = vmatprep.subr.mxu0 0.0
        %392 = vmatpush1.msra.mxu0 %v384
        %393 = vmatprep.subr.mxu0 0.0
        %394 = vmatpush1.msra.mxu0 %v385
        %395 = vmatprep.subr.mxu0 0.0
        %396 = vmatpush1.msra.mxu0 0.0
        %397 = vmatprep.subr.mxu0 0.0
        %398 = vmatpush1.msra.mxu0 0.0
        %399 = vmatprep.subr.mxu0 0.0
        %400 = vmatpush1.msra.mxu0 0.0
        %401 = vmatprep.subr.mxu0 0.0
        %402 = vmatpush1.msra.mxu0 0.0
        %403 = vmatprep.subr.mxu0 0.0
        %404 = vmatpush1.msra.mxu0 0.0
        %405 = vmatprep.subr.mxu0 0.0
        %406 = vmatpush1.msra.mxu0 0.0
        %407 = vmatprep.subr.mxu0 0.0
        %408 = vmatpush1.msra.mxu0 0.0
        %409 = vmatprep.subr.mxu0 0.0
        %410 = vmatpush1.msra.mxu0 0.0
        %411 = vmatprep.subr.mxu0 0.0
        %412 = vmatpush1.msra.mxu0 0.0
        %413 = vmatprep.subr.mxu0 0.0
        %414 = vmatpush1.msra.mxu0 0.0
        %415 = vmatprep.subr.mxu0 0.0
        %416 = vmatpush1.msra.mxu0 0.0
        %417 = vmatprep.subr.mxu0 0.0
        %418 = vmatpush1.msra.mxu0 0.0
        %419 = vmatprep.subr.mxu0 0.0
        %420 = vmatpush1.msra.mxu0 0.0
        %421 = vmatprep.subr.mxu0 0.0
        %422 = vmatpush1.msra.mxu0 0.0
        %423 = vmatprep.subr.mxu0 0.0
        %424 = vmatpush1.msra.mxu0 0.0
        %425 = vmatprep.subr.mxu0 0.0
        %426 = vmatpush1.msra.mxu0 0.0
        %427 = vmatprep.subr.mxu0 0.0
        %428 = vmatpush1.msra.mxu0 0.0
        %429 = vmatprep.subr.mxu0 0.0
        %430 = vmatpush1.msra.mxu0 0.0
        %431 = vmatprep.subr.mxu0 0.0
        %432 = vmatpush1.msra.mxu0 0.0
        %433 = vmatprep.subr.mxu0 0.0
        %434 = vmatpush1.msra.mxu0 0.0
        %435 = vmatprep.subr.mxu0 0.0
        %436 = vmatpush1.msra.mxu0 0.0
        %437 = vmatprep.subr.mxu0 0.0
        %438 = vmatpush1.msra.mxu0 0.0
        %439 = vmatprep.subr.mxu0 0.0
        %440 = vmatpush1.msra.mxu0 0.0
        %441 = vmatprep.subr.mxu0 0.0
        %442 = vmatpush1.msra.mxu0 0.0
        %443 = vmatprep.subr.mxu0 0.0
        %444 = vmatpush1.msra.mxu0 0.0
        %445 = vmatprep.subr.mxu0 0.0
        %446 = vmatpush1.msra.mxu0 0.0
        %447 = vmatprep.subr.mxu0 0.0
        %448 = vmatpush1.msra.mxu0 0.0
        %449 = vmatprep.subr.mxu0 0.0
        %450 = vmatpush1.msra.mxu0 0.0
        %451 = vmatprep.subr.mxu0 0.0
        %452 = vmatpush1.msra.mxu0 0.0
        %453 = vmatprep.subr.mxu0 0.0
        %454 = vmatpush1.msra.mxu0 0.0
        %455 = vmatprep.mubr.f32.mxu0 0.0
        %456 = vmatmul.mubr.f32.gmra.mrb[0].mxu0 %v389
        %v457 = vpop.f32.mrb[0].mxu0
        %v458 = vadd.f32 0.0, %v457
        %v459 = vpop.f32.mrb[0].mxu0
        %460 = vdwg.mxu0
        %v461 = vld [vmem:[%s371] sm:$0xf]
        %463 = vset.pattern.permute.xlu0 0
        %464 = vperm.xlu0 %463, %v461
        %v465 = vpop.permute.xlu0 %464
        %v467 = vmul.f32 %v458, %v465
        %v468 = vld [vmem:[%s2] sm:$0xff]
        %v469 = vld [vmem:[%s2 + $0x8] sm:$0xff]
        %v470 = vld [vmem:[%s3] sm:$0xff]
        %v471 = vld [vmem:[%s3 + $0x8] sm:$0xff]
        %vm472 = vcmask 31744
        %v474 = vsel %vm472, %v470, 0
        %v477 = vsel %vm472, %v471, 0
        %vm479 = vcmask 1043456
        %v481 = vsel %vm479, %v467, 0
        %483 = vmatprep.subr.mxu0 0.0
        %484 = vmatpush1.msra.mxu0 %v481
        %485 = vmatprep.subr.mxu0 0.0
        %486 = vmatpush1.msra.mxu0 0.0
        %487 = vmatprep.subr.mxu0 0.0
        %488 = vmatpush1.msra.mxu0 0.0
        %489 = vmatprep.subr.mxu0 0.0
        %490 = vmatpush1.msra.mxu0 0.0
        %491 = vmatprep.subr.mxu0 0.0
        %492 = vmatpush1.msra.mxu0 0.0
        %493 = vmatprep.subr.mxu0 0.0
        %494 = vmatpush1.msra.mxu0 0.0
        %495 = vmatprep.subr.mxu0 0.0
        %496 = vmatpush1.msra.mxu0 0.0
        %497 = vmatprep.subr.mxu0 0.0
        %498 = vmatpush1.msra.mxu0 0.0
        %499 = vmatprep.subr.mxu0 0.0
        %500 = vmatpush1.msra.mxu0 0.0
        %501 = vmatprep.subr.mxu0 0.0
        %502 = vmatpush1.msra.mxu0 0.0
        %503 = vmatprep.subr.mxu0 0.0
        %504 = vmatpush1.msra.mxu0 0.0
        %505 = vmatprep.subr.mxu0 0.0
        %506 = vmatpush1.msra.mxu0 0.0
        %507 = vmatprep.subr.mxu0 0.0
        %508 = vmatpush1.msra.mxu0 0.0
        %509 = vmatprep.subr.mxu0 0.0
        %510 = vmatpush1.msra.mxu0 0.0
        %511 = vmatprep.subr.mxu0 0.0
        %512 = vmatpush1.msra.mxu0 0.0
        %513 = vmatprep.subr.mxu0 0.0
        %514 = vmatpush1.msra.mxu0 0.0
        %515 = vmatprep.subr.mxu0 0.0
        %516 = vmatpush1.msra.mxu0 0.0
        %517 = vmatprep.subr.mxu0 0.0
        %518 = vmatpush1.msra.mxu0 0.0
        %519 = vmatprep.subr.mxu0 0.0
        %520 = vmatpush1.msra.mxu0 0.0
        %521 = vmatprep.subr.mxu0 0.0
        %522 = vmatpush1.msra.mxu0 0.0
        %523 = vmatprep.subr.mxu0 0.0
        %524 = vmatpush1.msra.mxu0 0.0
        %525 = vmatprep.subr.mxu0 0.0
        %526 = vmatpush1.msra.mxu0 0.0
        %527 = vmatprep.subr.mxu0 0.0
        %528 = vmatpush1.msra.mxu0 0.0
        %529 = vmatprep.subr.mxu0 0.0
        %530 = vmatpush1.msra.mxu0 0.0
        %531 = vmatprep.subr.mxu0 0.0
        %532 = vmatpush1.msra.mxu0 0.0
        %533 = vmatprep.subr.mxu0 0.0
        %534 = vmatpush1.msra.mxu0 0.0
        %535 = vmatprep.subr.mxu0 0.0
        %536 = vmatpush1.msra.mxu0 0.0
        %537 = vmatprep.subr.mxu0 0.0
        %538 = vmatpush1.msra.mxu0 0.0
        %539 = vmatprep.subr.mxu0 0.0
        %540 = vmatpush1.msra.mxu0 0.0
        %541 = vmatprep.subr.mxu0 0.0
        %542 = vmatpush1.msra.mxu0 0.0
        %543 = vmatprep.subr.mxu0 0.0
        %544 = vmatpush1.msra.mxu0 0.0
        %545 = vmatprep.subr.mxu0 0.0
        %546 = vmatpush1.msra.mxu0 0.0
        %547 = vmatprep.mubr.f32.mxu0 0.0
        %548 = vmatmul.mubr.f32.gmra.mrb[0].mxu0 %v474
        %v549 = vpop.f32.mrb[0].mxu0
        %v550 = vadd.f32 0.0, %v549
        %v551 = vpop.f32.mrb[0].mxu0
        %552 = vmatprep.mubr.f32.mxu0 0.0
        %553 = vmatmul.mubr.f32.gmra.mrb[0].mxu0 %v477
        %v554 = vpop.f32.mrb[0].mxu0
        %v555 = vadd.f32 0.0, %v554
        %v556 = vpop.f32.mrb[0].mxu0
        %557 = vdwg.mxu0
        %v559 = vsel %vm387, %v468, 0
        %v562 = vsel %vm387, %v469, 0
        %564 = vmatprep.subr.mxu0 0.0
        %565 = vmatpush1.msra.mxu0 %v384
        %566 = vmatprep.subr.mxu0 0.0
        %567 = vmatpush1.msra.mxu0 %v385
        %568 = vmatprep.subr.mxu0 0.0
        %569 = vmatpush1.msra.mxu0 0.0
        %570 = vmatprep.subr.mxu0 0.0
        %571 = vmatpush1.msra.mxu0 0.0
        %572 = vmatprep.subr.mxu0 0.0
        %573 = vmatpush1.msra.mxu0 0.0
        %574 = vmatprep.subr.mxu0 0.0
        %575 = vmatpush1.msra.mxu0 0.0
        %576 = vmatprep.subr.mxu0 0.0
        %577 = vmatpush1.msra.mxu0 0.0
        %578 = vmatprep.subr.mxu0 0.0
        %579 = vmatpush1.msra.mxu0 0.0
        %580 = vmatprep.subr.mxu0 0.0
        %581 = vmatpush1.msra.mxu0 0.0
        %582 = vmatprep.subr.mxu0 0.0
        %583 = vmatpush1.msra.mxu0 0.0
        %584 = vmatprep.subr.mxu0 0.0
        %585 = vmatpush1.msra.mxu0 0.0
        %586 = vmatprep.subr.mxu0 0.0
        %587 = vmatpush1.msra.mxu0 0.0
        %588 = vmatprep.subr.mxu0 0.0
        %589 = vmatpush1.msra.mxu0 0.0
        %590 = vmatprep.subr.mxu0 0.0
        %591 = vmatpush1.msra.mxu0 0.0
        %592 = vmatprep.subr.mxu0 0.0
        %593 = vmatpush1.msra.mxu0 0.0
        %594 = vmatprep.subr.mxu0 0.0
        %595 = vmatpush1.msra.mxu0 0.0
        %596 = vmatprep.subr.mxu0 0.0
        %597 = vmatpush1.msra.mxu0 0.0
        %598 = vmatprep.subr.mxu0 0.0
        %599 = vmatpush1.msra.mxu0 0.0
        %600 = vmatprep.subr.mxu0 0.0
        %601 = vmatpush1.msra.mxu0 0.0
        %602 = vmatprep.subr.mxu0 0.0
        %603 = vmatpush1.msra.mxu0 0.0
        %604 = vmatprep.subr.mxu0 0.0
        %605 = vmatpush1.msra.mxu0 0.0
        %606 = vmatprep.subr.mxu0 0.0
        %607 = vmatpush1.msra.mxu0 0.0
        %608 = vmatprep.subr.mxu0 0.0
        %609 = vmatpush1.msra.mxu0 0.0
        %610 = vmatprep.subr.mxu0 0.0
        %611 = vmatpush1.msra.mxu0 0.0
        %612 = vmatprep.subr.mxu0 0.0
        %613 = vmatpush1.msra.mxu0 0.0
        %614 = vmatprep.subr.mxu0 0.0
        %615 = vmatpush1.msra.mxu0 0.0
        %616 = vmatprep.subr.mxu0 0.0
        %617 = vmatpush1.msra.mxu0 0.0
        %618 = vmatprep.subr.mxu0 0.0
        %619 = vmatpush1.msra.mxu0 0.0
        %620 = vmatprep.subr.mxu0 0.0
        %621 = vmatpush1.msra.mxu0 0.0
        %622 = vmatprep.subr.mxu0 0.0
        %623 = vmatpush1.msra.mxu0 0.0
        %624 = vmatprep.subr.mxu0 0.0
        %625 = vmatpush1.msra.mxu0 0.0
        %626 = vmatprep.subr.mxu0 0.0
        %627 = vmatpush1.msra.mxu0 0.0
        %628 = vmatprep.mubr.f32.mxu0 0.0
        %629 = vmatmul.mubr.f32.gmra.mrb[0].mxu0 %v559
        %v630 = vpop.f32.mrb[0].mxu0
        %v631 = vadd.f32 %v550, %v630
        %v632 = vpop.f32.mrb[0].mxu0
        %633 = vmatprep.mubr.f32.mxu0 0.0
        %634 = vmatmul.mubr.f32.gmra.mrb[0].mxu0 %v562
        %v635 = vpop.f32.mrb[0].mxu0
        %v636 = vadd.f32 %v555, %v635
        %v637 = vpop.f32.mrb[0].mxu0
        %638 = vdwg.mxu0
        %v639 = vld [vmem:[%s5] sm:$0xff]
        %v640 = vld [vmem:[%s5 + $0x8] sm:$0xff]
        %642 = vset.pattern.permute.xlu0 0
        %643 = vperm.xlu0 %642, %v639
        %v644 = vpop.permute.xlu0 %643
        %647 = vset.pattern.permute.xlu0 0
        %648 = vperm.xlu0 %647, %v640
        %v649 = vpop.permute.xlu0 %648
        %v651 = vadd.f32 %v631, %v644
        %v652 = vadd.f32 %v636, %v649
        %v653 = vmax.f32 %v651, 0.0
        %v654 = vmax.f32 %v652, 0.0
        %v655 = vld [vmem:[%s6] sm:$0xff]
        %v656 = vld [vmem:[%s6 + $0x8] sm:$0xff]
        %v657 = vld [vmem:[%s7] sm:$0xff]
        %v658 = vld [vmem:[%s7 + $0x8] sm:$0xff]
        %660 = vset.pattern.permute.xlu0 0
        %661 = vperm.xlu0 %660, %v657
        %v662 = vpop.permute.xlu0 %661
        %665 = vset.pattern.permute.xlu0 0
        %666 = vperm.xlu0 %665, %v658
        %v667 = vpop.permute.xlu0 %666
        %v670 = vsel %vm387, %v655, 0
        %v673 = vsel %vm387, %v656, 0
        %675 = vmatprep.subr.mxu0 0.0
        %676 = vmatpush1.msra.mxu0 %v653
        %677 = vmatprep.subr.mxu0 0.0
        %678 = vmatpush1.msra.mxu0 %v654
        %679 = vmatprep.subr.mxu0 0.0
        %680 = vmatpush1.msra.mxu0 0.0
        %681 = vmatprep.subr.mxu0 0.0
        %682 = vmatpush1.msra.mxu0 0.0
        %683 = vmatprep.subr.mxu0 0.0
        %684 = vmatpush1.msra.mxu0 0.0
        %685 = vmatprep.subr.mxu0 0.0
        %686 = vmatpush1.msra.mxu0 0.0
        %687 = vmatprep.subr.mxu0 0.0
        %688 = vmatpush1.msra.mxu0 0.0
        %689 = vmatprep.subr.mxu0 0.0
        %690 = vmatpush1.msra.mxu0 0.0
        %691 = vmatprep.subr.mxu0 0.0
        %692 = vmatpush1.msra.mxu0 0.0
        %693 = vmatprep.subr.mxu0 0.0
        %694 = vmatpush1.msra.mxu0 0.0
        %695 = vmatprep.subr.mxu0 0.0
        %696 = vmatpush1.msra.mxu0 0.0
        %697 = vmatprep.subr.mxu0 0.0
        %698 = vmatpush1.msra.mxu0 0.0
        %699 = vmatprep.subr.mxu0 0.0
        %700 = vmatpush1.msra.mxu0 0.0
        %701 = vmatprep.subr.mxu0 0.0
        %702 = vmatpush1.msra.mxu0 0.0
        %703 = vmatprep.subr.mxu0 0.0
        %704 = vmatpush1.msra.mxu0 0.0
        %705 = vmatprep.subr.mxu0 0.0
        %706 = vmatpush1.msra.mxu0 0.0
        %707 = vmatprep.subr.mxu0 0.0
        %708 = vmatpush1.msra.mxu0 0.0
        %709 = vmatprep.subr.mxu0 0.0
        %710 = vmatpush1.msra.mxu0 0.0
        %711 = vmatprep.subr.mxu0 0.0
        %712 = vmatpush1.msra.mxu0 0.0
        %713 = vmatprep.subr.mxu0 0.0
        %714 = vmatpush1.msra.mxu0 0.0
        %715 = vmatprep.subr.mxu0 0.0
        %716 = vmatpush1.msra.mxu0 0.0
        %717 = vmatprep.subr.mxu0 0.0
        %718 = vmatpush1.msra.mxu0 0.0
        %719 = vmatprep.subr.mxu0 0.0
        %720 = vmatpush1.msra.mxu0 0.0
        %721 = vmatprep.subr.mxu0 0.0
        %722 = vmatpush1.msra.mxu0 0.0
        %723 = vmatprep.subr.mxu0 0.0
        %724 = vmatpush1.msra.mxu0 0.0
        %725 = vmatprep.subr.mxu0 0.0
        %726 = vmatpush1.msra.mxu0 0.0
        %727 = vmatprep.subr.mxu0 0.0
        %728 = vmatpush1.msra.mxu0 0.0
        %729 = vmatprep.subr.mxu0 0.0
        %730 = vmatpush1.msra.mxu0 0.0
        %731 = vmatprep.subr.mxu0 0.0
        %732 = vmatpush1.msra.mxu0 0.0
        %733 = vmatprep.subr.mxu0 0.0
        %734 = vmatpush1.msra.mxu0 0.0
        %735 = vmatprep.subr.mxu0 0.0
        %736 = vmatpush1.msra.mxu0 0.0
        %737 = vmatprep.subr.mxu0 0.0
        %738 = vmatpush1.msra.mxu0 0.0
        %739 = vmatprep.mubr.f32.mxu0 0.0
        %740 = vmatmul.mubr.f32.gmra.mrb[0].mxu0 %v670
        %v741 = vpop.f32.mrb[0].mxu0
        %v742 = vadd.f32 %v662, %v741
        %v743 = vpop.f32.mrb[0].mxu0
        %744 = vmatprep.mubr.f32.mxu0 0.0
        %745 = vmatmul.mubr.f32.gmra.mrb[0].mxu0 %v673
        %v746 = vpop.f32.mrb[0].mxu0
        %v747 = vadd.f32 %v667, %v746
        %v748 = vpop.f32.mrb[0].mxu0
        %749 = vdwg.mxu0
        %v750 = vadd.f32 %v742, %v384
        %v751 = vadd.f32 %v747, %v385
        %v752 = vld [vmem:[%s376] sm:$0xff]
        %v753 = vld [vmem:[%s376 + $0x8] sm:$0xff]
        %754 = vadd.xlane.f32.xlu0 %v750
        %v755 = vpop.xlane.xlu0 %754
        %756 = vadd.xlane.f32.xlu0 %v751
        %v757 = vpop.xlane.xlu0 %756
        %v758 = vadd.f32 %v752, %v755
        %v759 = vadd.f32 %v753, %v757
        %vm760 = vcmask 7168
        %761 = vst.msk [vmem:[%s376] sm:$0xff] %vm760, %v758
        %762 = vst.msk [vmem:[%s376 + $0x8] sm:$0xff] %vm760, %v759
        %p763 = scmp.lt.s32.totalorder %s23, 1
        %s764 = scalar_select %p763, %s23, 1
        %s765 = smul.addr %s764, 2
        %s766 = smul.addr %s765, 8
        %s767 = scalar_lea.vmem %s8, %s766
        // Predicated region
        $region95: #{attention_forward.4} parent=85 // pred_check
          %p768 = pneg %p229
        $region96: #{attention_forward.4} parent=85 // pred_check_branch
          %770 = sbr.rel (%p768) target = $region98
        $region97: #{attention_forward.4} parent=85 // pred_region
          _
        $region98: #{attention_forward.4} parent=85 // pred_fallthru
          _
      $region86: #{attention_forward.4} parent=5 // pred_fallthru
        _
      %p771 = scmp.le.s32.totalorder 2, %s14
      // Predicated region
      $region99: #{attention_forward.4} parent=5 // pred_check
        %p772 = pneg %p771
      $region100: #{attention_forward.4} parent=5 // pred_check_branch
        %774 = sbr.rel (%p772) target = $region102
      $region101: #{attention_forward.4} parent=5 // pred_region
        %s775 = ssub.s32 %s14, 2
        // Predicated region
        $region103: #{attention_forward.4} parent=101 // pred_check
          %p776 = pneg %p235
        $region104: #{attention_forward.4} parent=101 // pred_check_branch
          %778 = sbr.rel (%p776) target = $region106
        $region105: #{attention_forward.4} parent=101 // pred_region
          %p779 = scmp.lt.s32.totalorder %s25, 1
          %s780 = scalar_select %p779, %s25, 1
          %s781 = smul.addr %s780, 2
          %s782 = smul.addr %s781, 8
          %s783 = scalar_lea.vmem %s8, %s782
        $region106: #{attention_forward.4} parent=101 // pred_fallthru
          _
      $region102: #{attention_forward.4} parent=5 // pred_fallthru
        _
    $region6: #{attention_forward.4} parent=1 // loop_footer
      %s18 = sadd.s32 1, %s14
    $region7: #{attention_forward.4} parent=1 // loop_footer_branch
      %13 = sbr.rel target = $region3
    $region8: #{attention_forward.4} parent=1 // loop_exit
      _

// kernel: attention_forward.5
$region0: #{attention_forward.5}
  #allocation0 [shape = 'u32[]', space=smem, size = 0x4, offset = 0x4, fixed_abs, tag = 'smem constant byte address 0x4 - core index']
  #allocation1 [shape = 'u32[144,128]{1,0:T(1,128)}', space=vmem, size = 0x12000, scoped, tag = 'internal scratch']
  %s0 = inlined_call_operand.vmem [shape: f32[2,16,256], index: 0, kind: input, shape index: {}]
  %s1 = inlined_call_operand.vmem [shape: f32[4,16], index: 1, kind: input, shape index: {}]
  %s2 = inlined_call_operand.vmem [shape: f32[16,16], index: 2, kind: input, shape index: {}]
  %s3 = inlined_call_operand.vmem [shape: f32[16,4], index: 3, kind: input, shape index: {}]
  %s4 = inlined_call_operand.vmem [shape: f32[2,4,1], index: 4, kind: input, shape index: {}]
  %s5 = inlined_call_operand.vmem [shape: f32[16,1], index: 5, kind: input, shape index: {}]
  %s6 = inlined_call_operand.vmem [shape: f32[16,16], index: 6, kind: input, shape index: {}]
  %s7 = inlined_call_operand.vmem [shape: f32[16,1], index: 7, kind: input, shape index: {}]
  %s8 = inlined_call_operand.vmem [shape: f32[2,16,1], index: 8, kind: input, shape index: {}]
  %s9 = inlined_call_operand.vmem [shape: f32[2,16,256], index: 9, kind: output, shape index: {}]
  %s10 = sld [smem:[#allocation0]]
  $region141: #{attention_forward.5} parent=0
    _
  %s12 = ssub.s32 1, %s10
  %s13 = scalar_select 0, %s12, %s10
  $region1: #{attention_forward.5} parent=0
    #allocation2 [shape = 'u8[16384]{0}', space=vmem, size = 0x4000, scoped, tag = 'input window, operand 0']
    #allocation3 [shape = 'u8[16384]{0}', space=vmem, size = 0x4000, scoped, tag = 'output window, operand 0']
    loop: start=0, step=1, limit=6
    $region2: #{attention_forward.5} parent=1 // loop_pre_header
      _
    $region3: #{attention_forward.5} parent=1 // loop_header
      %s15 = sphi 0, %s19
      %p16 = scmp.ge.s32.totalorder %s15, 6
      %s22 = sphi 0, %s34
      %s23 = sphi 0, %s30
      %s24 = sphi 0, %s22
      %s25 = sphi 0, %s23
      %s26 = sphi 0, %s24
      %s27 = sphi 0, %s25
      %s39 = sphi 0, %s41
      %s42 = sphi 0, %s39
      %s43 = sphi 0, %s42
      %s59 = sphi 0, %s43
      %s63 = sphi 0, %s63
      %s65 = sphi 0, %s63
      %s66 = sphi 0, %s65
      %s80 = sphi 0, %s66
      %s84 = sphi 0, %s84
      %s86 = sphi 0, %s84
      %s87 = sphi 0, %s86
      %s101 = sphi 0, %s87
      %s105 = sphi 0, %s105
      %s107 = sphi 0, %s105
      %s108 = sphi 0, %s107
      %s122 = sphi 0, %s108
      %s128 = sphi 0, %s130
      %s131 = sphi 0, %s128
      %s132 = sphi 0, %s131
      %s148 = sphi 0, %s132
      %s152 = sphi 0, %s152
      %s154 = sphi 0, %s152
      %s155 = sphi 0, %s154
      %s169 = sphi 0, %s155
      %s173 = sphi 0, %s173
      %s175 = sphi 0, %s173
      %s176 = sphi 0, %s175
      %s190 = sphi 0, %s176
      %s194 = sphi 0, %s194
      %s196 = sphi 0, %s194
      %s197 = sphi 0, %s196
      %s211 = sphi 0, %s197
      %s217 = sphi 0, %s219
      %s220 = sphi 0, %s217
      %s221 = sphi 0, %s220
      %s237 = sphi 0, %s221
      %s245 = sphi 0, %s247
      %s248 = sphi 0, %s245
      %s249 = sphi 0, %s248
      %s265 = sphi 0, %s249
    $region4: #{attention_forward.5} parent=1 // loop_header_branch
      %18 = sbr.rel (%p16) target = $region8
    $region5: #{attention_forward.5} parent=1 // loop_body
      %s20 = ssub.s32 %s15, 1
      %s21 = ssub.s32 %s15, 2
      %s28 = sadd.s32 1, %s23
      %p29 = scmp.ge.s32.totalorder %s28, 2
      %s30 = scalar_select %p29, 0, %s28
      %s31 = sadd.s32 1, %s22
      %s32 = scalar_select %p29, %s31, %s22
      %p33 = scmp.ge.s32.totalorder %s32, 2
      %s34 = scalar_select %p33, 0, %s32
      %s35 = ssub.s32 %s22, %s34
      %s36 = ssub.s32 %s23, %s30
      %s37 = sor.u32 %s35, %s36
      %p38 = scmp.eq.s32.totalorder %s37, 0
      %s40 = sadd.s32 %s39, 1
      %s41 = scalar_select %p38, %s39, %s40
      %p44 = pneg %p38
      %p45 = scmp.eq.s32.totalorder %s15, 3
      %p46 = por %p44, %p45
      %p47 = scmp.ne.s32.totalorder %s39, %s42
      %p48 = scmp.eq.s32.totalorder %s15, 0
      %p49 = por %p47, %p48
      %p50 = scmp.ne.s32.totalorder %s39, %s42
      %p51 = scmp.eq.s32.totalorder %s20, 3
      %p52 = por %p50, %p51
      %p53 = scmp.ne.s32.totalorder %s42, %s43
      %p54 = scmp.eq.s32.totalorder %s20, 0
      %p55 = por %p53, %p54
      %p56 = scmp.ne.s32.totalorder %s42, %s43
      %p57 = scmp.eq.s32.totalorder %s21, 3
      %p58 = por %p56, %p57
      %p60 = scmp.ne.s32.totalorder %s43, %s59
      %p61 = scmp.eq.s32.totalorder %s21, 0
      %p62 = por %p60, %p61
      %s64 = sadd.s32 %s63, 1
      %p67 = scmp.eq.s32.totalorder %s15, 3
      %p68 = scmp.ne.s32.totalorder %s63, %s65
      %p69 = scmp.eq.s32.totalorder %s15, 0
      %p70 = por %p68, %p69
      %p71 = scmp.ne.s32.totalorder %s63, %s65
      %p72 = scmp.eq.s32.totalorder %s20, 3
      %p73 = por %p71, %p72
      %p74 = scmp.ne.s32.totalorder %s65, %s66
      %p75 = scmp.eq.s32.totalorder %s20, 0
      %p76 = por %p74, %p75
      %p77 = scmp.ne.s32.totalorder %s65, %s66
      %p78 = scmp.eq.s32.totalorder %s21, 3
      %p79 = por %p77, %p78
      %p81 = scmp.ne.s32.totalorder %s66, %s80
      %p82 = scmp.eq.s32.totalorder %s21, 0
      %p83 = por %p81, %p82
      %s85 = sadd.s32 %s84, 1
      %p88 = scmp.eq.s32.totalorder %s15, 3
      %p89 = scmp.ne.s32.totalorder %s84, %s86
      %p90 = scmp.eq.s32.totalorder %s15, 0
      %p91 = por %p89, %p90
      %p92 = scmp.ne.s32.totalorder %s84, %s86
      %p93 = scmp.eq.s32.totalorder %s20, 3
      %p94 = por %p92, %p93
      %p95 = scmp.ne.s32.totalorder %s86, %s87
      %p96 = scmp.eq.s32.totalorder %s20, 0
      %p97 = por %p95, %p96
      %p98 = scmp.ne.s32.totalorder %s86, %s87
      %p99 = scmp.eq.s32.totalorder %s21, 3
      %p100 = por %p98, %p99
      %p102 = scmp.ne.s32.totalorder %s87, %s101
      %p103 = scmp.eq.s32.totalorder %s21, 0
      %p104 = por %p102, %p103
      %s106 = sadd.s32 %s105, 1
      %p109 = scmp.eq.s32.totalorder %s15, 3
      %p110 = scmp.ne.s32.totalorder %s105, %s107
      %p111 = scmp.eq.s32.totalorder %s15, 0
      %p112 = por %p110, %p111
      %p113 = scmp.ne.s32.totalorder %s105, %s107
      %p114 = scmp.eq.s32.totalorder %s20, 3
      %p115 = por %p113, %p114
      %p116 = scmp.ne.s32.totalorder %s107, %s108
      %p117 = scmp.eq.s32.totalorder %s20, 0
      %p118 = por %p116, %p117
      %p119 = scmp.ne.s32.totalorder %s107, %s108
      %p120 = scmp.eq.s32.totalorder %s21, 3
      %p121 = por %p119, %p120
      %p123 = scmp.ne.s32.totalorder %s108, %s122
      %p124 = scmp.eq.s32.totalorder %s21, 0
      %p125 = por %p123, %p124
      %s126 = ssub.s32 %s22, %s34
      %p127 = scmp.eq.s32.totalorder %s126, 0
      %s129 = sadd.s32 %s128, 1
      %s130 = scalar_select %p127, %s128, %s129
      %p133 = pneg %p127
      %p134 = scmp.eq.s32.totalorder %s15, 3
      %p135 = por %p133, %p134
      %p136 = scmp.ne.s32.totalorder %s128, %s131
      %p137 = scmp.eq.s32.totalorder %s15, 0
      %p138 = por %p136, %p137
      %p139 = scmp.ne.s32.totalorder %s128, %s131
      %p140 = scmp.eq.s32.totalorder %s20, 3
      %p141 = por %p139, %p140
      %p142 = scmp.ne.s32.totalorder %s131, %s132
      %p143 = scmp.eq.s32.totalorder %s20, 0
      %p144 = por %p142, %p143
      %p145 = scmp.ne.s32.totalorder %s131, %s132
      %p146 = scmp.eq.s32.totalorder %s21, 3
      %p147 = por %p145, %p146
      %p149 = scmp.ne.s32.totalorder %s132, %s148
      %p150 = scmp.eq.s32.totalorder %s21, 0
      %p151 = por %p149, %p150
      %s153 = sadd.s32 %s152, 1
      %p156 = scmp.eq.s32.totalorder %s15, 3
      %p157 = scmp.ne.s32.totalorder %s152, %s154
      %p158 = scmp.eq.s32.totalorder %s15, 0
      %p159 = por %p157, %p158
      %p160 = scmp.ne.s32.totalorder %s152, %s154
      %p161 = scmp.eq.s32.totalorder %s20, 3
      %p162 = por %p160, %p161
      %p163 = scmp.ne.s32.totalorder %s154, %s155
      %p164 = scmp.eq.s32.totalorder %s20, 0
      %p165 = por %p163, %p164
      %p166 = scmp.ne.s32.totalorder %s154, %s155
      %p167 = scmp.eq.s32.totalorder %s21, 3
      %p168 = por %p166, %p167
      %p170 = scmp.ne.s32.totalorder %s155, %s169
      %p171 = scmp.eq.s32.totalorder %s21, 0
      %p172 = por %p170, %p171
      %s174 = sadd.s32 %s173, 1
      %p177 = scmp.eq.s32.totalorder %s15, 3
      %p178 = scmp.ne.s32.totalorder %s173, %s175
      %p179 = scmp.eq.s32.totalorder %s15, 0
      %p180 = por %p178, %p179
      %p181 = scmp.ne.s32.totalorder %s173, %s175
      %p182 = scmp.eq.s32.totalorder %s20, 3
      %p183 = por %p181, %p182
      %p184 = scmp.ne.s32.totalorder %s175, %s176
      %p185 = scmp.eq.s32.totalorder %s20, 0
      %p186 = por %p184, %p185
      %p187 = scmp.ne.s32.totalorder %s175, %s176
      %p188 = scmp.eq.s32.totalorder %s21, 3
      %p189 = por %p187, %p188
      %p191 = scmp.ne.s32.totalorder %s176, %s190
      %p192 = scmp.eq.s32.totalorder %s21, 0
      %p193 = por %p191, %p192
      %s195 = sadd.s32 %s194, 1
      %p198 = scmp.eq.s32.totalorder %s15, 3
      %p199 = scmp.ne.s32.totalorder %s194, %s196
      %p200 = scmp.eq.s32.totalorder %s15, 0
      %p201 = por %p199, %p200
      %p202 = scmp.ne.s32.totalorder %s194, %s196
      %p203 = scmp.eq.s32.totalorder %s20, 3
      %p204 = por %p202, %p203
      %p205 = scmp.ne.s32.totalorder %s196, %s197
      %p206 = scmp.eq.s32.totalorder %s20, 0
      %p207 = por %p205, %p206
      %p208 = scmp.ne.s32.totalorder %s196, %s197
      %p209 = scmp.eq.s32.totalorder %s21, 3
      %p210 = por %p208, %p209
      %p212 = scmp.ne.s32.totalorder %s197, %s211
      %p213 = scmp.eq.s32.totalorder %s21, 0
      %p214 = por %p212, %p213
      %s215 = ssub.s32 %s22, %s34
      %p216 = scmp.eq.s32.totalorder %s215, 0
      %s218 = sadd.s32 %s217, 1
      %s219 = scalar_select %p216, %s217, %s218
      %p222 = pneg %p216
      %p223 = scmp.eq.s32.totalorder %s15, 3
      %p224 = por %p222, %p223
      %p225 = scmp.ne.s32.totalorder %s217, %s220
      %p226 = scmp.eq.s32.totalorder %s15, 0
      %p227 = por %p225, %p226
      %p228 = scmp.ne.s32.totalorder %s217, %s220
      %p229 = scmp.eq.s32.totalorder %s20, 3
      %p230 = por %p228, %p229
      %p231 = scmp.ne.s32.totalorder %s220, %s221
      %p232 = scmp.eq.s32.totalorder %s20, 0
      %p233 = por %p231, %p232
      %p234 = scmp.ne.s32.totalorder %s220, %s221
      %p235 = scmp.eq.s32.totalorder %s21, 3
      %p236 = por %p234, %p235
      %p238 = scmp.ne.s32.totalorder %s221, %s237
      %p239 = scmp.eq.s32.totalorder %s21, 0
      %p240 = por %p238, %p239
      %s241 = ssub.s32 %s22, %s34
      %s242 = ssub.s32 %s23, %s30
      %s243 = sor.u32 %s241, %s242
      %p244 = scmp.eq.s32.totalorder %s243, 0
      %s246 = sadd.s32 %s245, 1
      %s247 = scalar_select %p244, %s245, %s246
      %p250 = pneg %p244
      %p251 = scmp.eq.s32.totalorder %s15, 3
      %p252 = por %p250, %p251
      %p253 = scmp.ne.s32.totalorder %s245, %s248
      %p254 = scmp.eq.s32.totalorder %s15, 0
      %p255 = por %p253, %p254
      %p256 = scmp.ne.s32.totalorder %s245, %s248
      %p257 = scmp.eq.s32.totalorder %s20, 3
      %p258 = por %p256, %p257
      %p259 = scmp.ne.s32.totalorder %s248, %s249
      %p260 = scmp.eq.s32.totalorder %s20, 0
      %p261 = por %p259, %p260
      %p262 = scmp.ne.s32.totalorder %s248, %s249
      %p263 = scmp.eq.s32.totalorder %s21, 3
      %p264 = por %p262, %p263
      %p266 = scmp.ne.s32.totalorder %s249, %s265
      %p267 = scmp.eq.s32.totalorder %s21, 0
      %p268 = por %p266, %p267
      %p269 = scmp.le.s32.totalorder 1, %s15
      %p270 = scmp.lt.s32.totalorder %s15, 5
      %p271 = pnand %p269, %p270
      %p272 = pneg %p271
      // Predicated region
      $region9: #{attention_forward.5} parent=5 // pred_check
        _
      $region10: #{attention_forward.5} parent=5 // pred_check_branch
        %274 = sbr.rel (%p271) target = $region12
      $region11: #{attention_forward.5} parent=5 // pred_region
        %s275 = ssub.s32 %s15, 1
        // Predicated region
        $region13: #{attention_forward.5} parent=11 // pred_check
          %p276 = pneg %p76
        $region14: #{attention_forward.5} parent=11 // pred_check_branch
          %278 = sbr.rel (%p276) target = $region16
        $region15: #{attention_forward.5} parent=11 // pred_region
          _
        $region16: #{attention_forward.5} parent=11 // pred_fallthru
          _
        // Predicated region
        $region17: #{attention_forward.5} parent=11 // pred_check
          %p279 = pneg %p97
        $region18: #{attention_forward.5} parent=11 // pred_check_branch
          %281 = sbr.rel (%p279) target = $region20
        $region19: #{attention_forward.5} parent=11 // pred_region
          _
        $region20: #{attention_forward.5} parent=11 // pred_fallthru
          _
        // Predicated region
        $region21: #{attention_forward.5} parent=11 // pred_check
          %p282 = pneg %p118
        $region22: #{attention_forward.5} parent=11 // pred_check_branch
          %284 = sbr.rel (%p282) target = $region24
        $region23: #{attention_forward.5} parent=11 // pred_region
          _
        $region24: #{attention_forward.5} parent=11 // pred_fallthru
          _
        // Predicated region
        $region25: #{attention_forward.5} parent=11 // pred_check
          %p285 = pneg %p165
        $region26: #{attention_forward.5} parent=11 // pred_check_branch
          %287 = sbr.rel (%p285) target = $region28
        $region27: #{attention_forward.5} parent=11 // pred_region
          _
        $region28: #{attention_forward.5} parent=11 // pred_fallthru
          _
        // Predicated region
        $region29: #{attention_forward.5} parent=11 // pred_check
          %p288 = pneg %p186
        $region30: #{attention_forward.5} parent=11 // pred_check_branch
          %290 = sbr.rel (%p288) target = $region32
        $region31: #{attention_forward.5} parent=11 // pred_region
          _
        $region32: #{attention_forward.5} parent=11 // pred_fallthru
          _
        // Predicated region
        $region33: #{attention_forward.5} parent=11 // pred_check
          %p291 = pneg %p207
        $region34: #{attention_forward.5} parent=11 // pred_check_branch
          %293 = sbr.rel (%p291) target = $region36
        $region35: #{attention_forward.5} parent=11 // pred_region
          _
        $region36: #{attention_forward.5} parent=11 // pred_fallthru
          _
      $region12: #{attention_forward.5} parent=5 // pred_fallthru
        _
      %p294 = scmp.lt.s32.totalorder %s15, 4
      // Predicated region
      $region37: #{attention_forward.5} parent=5 // pred_check
        %p295 = pneg %p294
      $region38: #{attention_forward.5} parent=5 // pred_check_branch
        %297 = sbr.rel (%p295) target = $region40
      $region39: #{attention_forward.5} parent=5 // pred_region
        // Predicated region
        $region41: #{attention_forward.5} parent=39 // pred_check
          %p298 = pneg %p49
        $region42: #{attention_forward.5} parent=39 // pred_check_branch
          %300 = sbr.rel (%p298) target = $region44
        $region43: #{attention_forward.5} parent=39 // pred_region
          %s301 = sand.u32 %s39, 1
          %s302 = sand.u32 %s39, 1
          %s303 = smul.addr %s302, 16
          %s304 = scalar_lea.vmem [#allocation2], %s303
          %s305 = smul.addr %s22, 4
          %s306 = sadd.s32 %s23, %s305
          %s307 = smul.addr %s306, 8
          %s308 = scalar_lea.vmem %s0, %s307
          // Predicated region
          $region45: #{attention_forward.5} parent=43 // pred_check
            _
          $region46: #{attention_forward.5} parent=43 // pred_check_branch
            %310 = sbr.rel (0) target = $region48
          $region47: #{attention_forward.5} parent=43 // pred_region
            // Predicated region
            $region49: #{attention_forward.5} parent=47 // pred_check
              _
            $region50: #{attention_forward.5} parent=47 // pred_check_branch
              %312 = sbr.rel (0) target = $region52
            $region51: #{attention_forward.5} parent=47 // pred_region
              // Predicated region
              $region64: #{attention_forward.5} parent=51 // pred_check
                _
              $region65: #{attention_forward.5} parent=51 // pred_check_branch
                %329 = sbr.rel (0) target = $region67
              $region66: #{attention_forward.5} parent=51 // pred_region
                loop: start=0, step=1, limit=1
                $region68: #{attention_forward.5} parent=66 // loop_pre_header
                  _
                $region69: #{attention_forward.5} parent=66 // loop_header
                  %s331 = sphi 0, %s335
                  %p332 = scmp.ge.s32.totalorder %s331, 1
                  %s336 = sphi %s308, %s308
                  %s337 = sphi %s304, %s304
                $region70: #{attention_forward.5} parent=66 // loop_header_branch
                  %334 = sbr.rel (%p332) target = $region74
                $region71: #{attention_forward.5} parent=66 // loop_body
                  %v338 = vld [vmem:[%s336] sm:$0xff]
                  %339 = vst [vmem:[%s337] sm:$0xff] %v338
                  %v340 = vld [vmem:[%s336 + $0x10] sm:$0xff]
                  %341 = vst [vmem:[%s337 + $0x8] sm:$0xff] %v340
                $region72: #{attention_forward.5} parent=66 // loop_footer
                  %s335 = sadd.s32 1, %s331
                $region73: #{attention_forward.5} parent=66 // loop_footer_branch
                  %330 = sbr.rel target = $region69
                $region74: #{attention_forward.5} parent=66 // loop_exit
                  _
              $region67: #{attention_forward.5} parent=51 // pred_fallthru
                _
              // Predicated region
              $region75: #{attention_forward.5} parent=51 // pred_check
                _
              $region76: #{attention_forward.5} parent=51 // pred_check_branch
                %343 = sbr.rel target = $region78
              $region77: #{attention_forward.5} parent=51 // pred_region
                _
              $region78: #{attention_forward.5} parent=51 // pred_fallthru
                _
            $region52: #{attention_forward.5} parent=47 // pred_fallthru
              _
            // Predicated region
            $region53: #{attention_forward.5} parent=47 // pred_check
              _
            $region54: #{attention_forward.5} parent=47 // pred_check_branch
              %314 = sbr.rel target = $region56
            $region55: #{attention_forward.5} parent=47 // pred_region
              loop: start=0, step=1, limit=1
              $region57: #{attention_forward.5} parent=55 // loop_pre_header
                _
              $region58: #{attention_forward.5} parent=55 // loop_header
                %s317 = sphi 0, %s321
                %p318 = scmp.ge.s32.totalorder %s317, 1
                %s322 = sphi %s308, %s308
                %s323 = sphi %s304, %s304
              $region59: #{attention_forward.5} parent=55 // loop_header_branch
                %320 = sbr.rel (%p318) target = $region63
              $region60: #{attention_forward.5} parent=55 // loop_body
                %v324 = vld [vmem:[%s322] sm:$0xff]
                %325 = vst [vmem:[%s323] sm:$0xff] %v324
                %v326 = vld [vmem:[%s322 + $0x10] sm:$0xff]
                %327 = vst [vmem:[%s323 + $0x8] sm:$0xff] %v326
              $region61: #{attention_forward.5} parent=55 // loop_footer
                %s321 = sadd.s32 1, %s317
              $region62: #{attention_forward.5} parent=55 // loop_footer_branch
                %316 = sbr.rel target = $region58
              $region63: #{attention_forward.5} parent=55 // loop_exit
                _
            $region56: #{attention_forward.5} parent=47 // pred_fallthru
              _
          $region48: #{attention_forward.5} parent=43 // pred_fallthru
            _
          %344 = vnop
        $region44: #{attention_forward.5} parent=39 // pred_fallthru
          _
        // Predicated region
        $region79: #{attention_forward.5} parent=39 // pred_check
          %p345 = pneg %p138
        $region80: #{attention_forward.5} parent=39 // pred_check_branch
          %347 = sbr.rel (%p345) target = $region82
        $region81: #{attention_forward.5} parent=39 // pred_region
          %p348 = scmp.lt.s32.totalorder %s22, 1
          %s349 = scalar_select %p348, %s22, 1
          %s350 = smul.addr %s349, 4
          %s351 = scalar_lea.vmem %s4, %s350
        $region82: #{attention_forward.5} parent=39 // pred_fallthru
          _
        // Predicated region
        $region83: #{attention_forward.5} parent=39 // pred_check
          %p352 = pneg %p227
        $region84: #{attention_forward.5} parent=39 // pred_check_branch
          %354 = sbr.rel (%p352) target = $region86
        $region85: #{attention_forward.5} parent=39 // pred_region
          %p355 = scmp.lt.s32.totalorder %s22, 1
          %s356 = scalar_select %p355, %s22, 1
          %s357 = smul.addr %s356, 2
          %s358 = smul.addr %s357, 8
          %s359 = scalar_lea.vmem %s8, %s358
        $region86: #{attention_forward.5} parent=39 // pred_fallthru
          _
      $region40: #{attention_forward.5} parent=5 // pred_fallthru
        _
      %p360 = scmp.le.s32.totalorder 1, %s15
      %p361 = scmp.lt.s32.totalorder %s15, 5
      %p362 = pnand %p360, %p361
      %p363 = pneg %p362
      // Predicated region
      $region87: #{attention_forward.5} parent=5 // pred_check
        _
      $region88: #{attention_forward.5} parent=5 // pred_check_branch
        %365 = sbr.rel (%p362) target = $region90
      $region89: #{attention_forward.5} parent=5 // pred_region
        %s366 = ssub.s32 %s15, 1
        %s367 = sand.u32 %s42, 1
        %s368 = sand.u32 %s42, 1
        %s369 = smul.addr %s368, 16
        %s370 = scalar_lea.vmem [#allocation2], %s369
        // Predicated region
        $region91: #{attention_forward.5} parent=89 // pred_check
          %p371 = pneg %p55
        $region92: #{attention_forward.5} parent=89 // pred_check_branch
          %373 = sbr.rel (%p371) target = $region94
        $region93: #{attention_forward.5} parent=89 // pred_region
          _
        $region94: #{attention_forward.5} parent=89 // pred_fallthru
          _
        %s374 = sand.u32 %s42, 1
        %s375 = sand.u32 %s42, 1
        %s376 = smul.addr %s375, 16
        %s377 = scalar_lea.vmem [#allocation2], %s376
        %p378 = pneg %p55
        %p379 = pneg %p52
        %p380 = pneg %p76
        %p381 = pneg %p73
        %p382 = pneg %p97
        %p383 = pneg %p94
        %p384 = pneg %p118
        %p385 = pneg %p115
        %p386 = scmp.lt.s32.totalorder %s24, 1
        %s387 = scalar_select %p386, %s24, 1
        %s388 = smul.addr %s387, 4
        %s389 = scalar_lea.vmem %s4, %s388
        %p390 = pneg %p144
        %p391 = pneg %p141
        %p392 = pneg %p165
        %p393 = pneg %p162
        %p394 = pneg %p186
        %p395 = pneg %p183
        %p396 = pneg %p207
        %p397 = pneg %p204
        %p398 = scmp.lt.s32.totalorder %s24, 1
        %s399 = scalar_select %p398, %s24, 1
        %s400 = smul.addr %s399, 2
        %s401 = smul.addr %s400, 8
        %s402 = scalar_lea.vmem %s8, %s401
        %p403 = pneg %p233
        %p404 = pneg %p230
        %p405 = pneg %p261
        %p406 = pneg %p258
        %s407 = sand.u32 %s248, 1
        %s408 = sand.u32 %s248, 1
        %s409 = smul.addr %s408, 16
        %s410 = scalar_lea.vmem [#allocation3], %s409
        %p411 = scmp.lt.s32.totalorder %s24, 1
        %s412 = scalar_select %p411, %s24, 1
        %s413 = smul.addr %s412, 4
        %s414 = scalar_lea.vmem %s4, %s413
        %p415 = scmp.lt.s32.totalorder %s24, 1
        %s416 = scalar_select %p415, %s24, 1
        %s417 = smul.addr %s416, 2
        %s418 = smul.addr %s417, 8
        %s419 = scalar_lea.vmem %s8, %s418
        %v420 = vld [vmem:[%s370] sm:$0xff]
        %v421 = vld [vmem:[%s370 + $0x8] sm:$0xff]
        %v422 = vld [vmem:[%s1] sm:$0xf]
        %vm423 = vcmask 130048
        %v425 = vsel %vm423, %v422, 0
        %427 = vmatprep.subr.mxu0 0.0
        %428 = vmatpush1.msra.mxu0 %v420
        %429 = vmatprep.subr.mxu0 0.0
        %430 = vmatpush1.msra.mxu0 %v421
        %431 = vmatprep.subr.mxu0 0.0
        %432 = vmatpush1.msra.mxu0 0.0
        %433 = vmatprep.subr.mxu0 0.0
        %434 = vmatpush1.msra.mxu0 0.0
        %435 = vmatprep.subr.mxu0 0.0
        %436 = vmatpush1.msra.mxu0 0.0
        %437 = vmatprep.subr.mxu0 0.0
        %438 = vmatpush1.msra.mxu0 0.0
        %439 = vmatprep.subr.mxu0 0.0
        %440 = vmatpush1.msra.mxu0 0.0
        %441 = vmatprep.subr.mxu0 0.0
        %442 = vmatpush1.msra.mxu0 0.0
        %443 = vmatprep.subr.mxu0 0.0
        %444 = vmatpush1.msra.mxu0 0.0
        %445 = vmatprep.subr.mxu0 0.0
        %446 = vmatpush1.msra.mxu0 0.0
        %447 = vmatprep.subr.mxu0 0.0
        %448 = vmatpush1.msra.mxu0 0.0
        %449 = vmatprep.subr.mxu0 0.0
        %450 = vmatpush1.msra.mxu0 0.0
        %451 = vmatprep.subr.mxu0 0.0
        %452 = vmatpush1.msra.mxu0 0.0
        %453 = vmatprep.subr.mxu0 0.0
        %454 = vmatpush1.msra.mxu0 0.0
        %455 = vmatprep.subr.mxu0 0.0
        %456 = vmatpush1.msra.mxu0 0.0
        %457 = vmatprep.subr.mxu0 0.0
        %458 = vmatpush1.msra.mxu0 0.0
        %459 = vmatprep.subr.mxu0 0.0
        %460 = vmatpush1.msra.mxu0 0.0
        %461 = vmatprep.subr.mxu0 0.0
        %462 = vmatpush1.msra.mxu0 0.0
        %463 = vmatprep.subr.mxu0 0.0
        %464 = vmatpush1.msra.mxu0 0.0
        %465 = vmatprep.subr.mxu0 0.0
        %466 = vmatpush1.msra.mxu0 0.0
        %467 = vmatprep.subr.mxu0 0.0
        %468 = vmatpush1.msra.mxu0 0.0
        %469 = vmatprep.subr.mxu0 0.0
        %470 = vmatpush1.msra.mxu0 0.0
        %471 = vmatprep.subr.mxu0 0.0
        %472 = vmatpush1.msra.mxu0 0.0
        %473 = vmatprep.subr.mxu0 0.0
        %474 = vmatpush1.msra.mxu0 0.0
        %475 = vmatprep.subr.mxu0 0.0
        %476 = vmatpush1.msra.mxu0 0.0
        %477 = vmatprep.subr.mxu0 0.0
        %478 = vmatpush1.msra.mxu0 0.0
        %479 = vmatprep.subr.mxu0 0.0
        %480 = vmatpush1.msra.mxu0 0.0
        %481 = vmatprep.subr.mxu0 0.0
        %482 = vmatpush1.msra.mxu0 0.0
        %483 = vmatprep.subr.mxu0 0.0
        %484 = vmatpush1.msra.mxu0 0.0
        %485 = vmatprep.subr.mxu0 0.0
        %486 = vmatpush1.msra.mxu0 0.0
        %487 = vmatprep.subr.mxu0 0.0
        %488 = vmatpush1.msra.mxu0 0.0
        %489 = vmatprep.subr.mxu0 0.0
        %490 = vmatpush1.msra.mxu0 0.0
        %491 = vmatprep.mubr.f32.mxu0 0.0
        %492 = vmatmul.mubr.f32.gmra.mrb[0].mxu0 %v425
        %v493 = vpop.f32.mrb[0].mxu0
        %v494 = vadd.f32 0.0, %v493
        %v495 = vpop.f32.mrb[0].mxu0
        %496 = vdwg.mxu0
        %v497 = vld [vmem:[%s414] sm:$0xf]
        %499 = vset.pattern.permute.xlu0 0
        %500 = vperm.xlu0 %499, %v497
        %v501 = vpop.permute.xlu0 %500
        %v503 = vmul.f32 %v494, %v501
        %v504 = vld [vmem:[%s2] sm:$0xff]
        %v505 = vld [vmem:[%s2 + $0x8] sm:$0xff]
        %v506 = vld [vmem:[%s3] sm:$0xff]
        %v507 = vld [vmem:[%s3 + $0x8] sm:$0xff]
        %vm508 = vcmask 31744
        %v510 = vsel %vm508, %v506, 0
        %v513 = vsel %vm508, %v507, 0
        %vm515 = vcmask 1043456
        %v517 = vsel %vm515, %v503, 0
        %519 = vmatprep.subr.mxu0 0.0
        %520 = vmatpush1.msra.mxu0 %v517
        %521 = vmatprep.subr.mxu0 0.0
        %522 = vmatpush1.msra.mxu0 0.0
        %523 = vmatprep.subr.mxu0 0.0
        %524 = vmatpush1.msra.mxu0 0.0
        %525 = vmatprep.subr.mxu0 0.0
        %526 = vmatpush1.msra.mxu0 0.0
        %527 = vmatprep.subr.mxu0 0.0
        %528 = vmatpush1.msra.mxu0 0.0
        %529 = vmatprep.subr.mxu0 0.0
        %530 = vmatpush1.msra.mxu0 0.0
        %531 = vmatprep.subr.mxu0 0.0
        %532 = vmatpush1.msra.mxu0 0.0
        %533 = vmatprep.subr.mxu0 0.0
        %534 = vmatpush1.msra.mxu0 0.0
        %535 = vmatprep.subr.mxu0 0.0
        %536 = vmatpush1.msra.mxu0 0.0
        %537 = vmatprep.subr.mxu0 0.0
        %538 = vmatpush1.msra.mxu0 0.0
        %539 = vmatprep.subr.mxu0 0.0
        %540 = vmatpush1.msra.mxu0 0.0
        %541 = vmatprep.subr.mxu0 0.0
        %542 = vmatpush1.msra.mxu0 0.0
        %543 = vmatprep.subr.mxu0 0.0
        %544 = vmatpush1.msra.mxu0 0.0
        %545 = vmatprep.subr.mxu0 0.0
        %546 = vmatpush1.msra.mxu0 0.0
        %547 = vmatprep.subr.mxu0 0.0
        %548 = vmatpush1.msra.mxu0 0.0
        %549 = vmatprep.subr.mxu0 0.0
        %550 = vmatpush1.msra.mxu0 0.0
        %551 = vmatprep.subr.mxu0 0.0
        %552 = vmatpush1.msra.mxu0 0.0
        %553 = vmatprep.subr.mxu0 0.0
        %554 = vmatpush1.msra.mxu0 0.0
        %555 = vmatprep.subr.mxu0 0.0
        %556 = vmatpush1.msra.mxu0 0.0
        %557 = vmatprep.subr.mxu0 0.0
        %558 = vmatpush1.msra.mxu0 0.0
        %559 = vmatprep.subr.mxu0 0.0
        %560 = vmatpush1.msra.mxu0 0.0
        %561 = vmatprep.subr.mxu0 0.0
        %562 = vmatpush1.msra.mxu0 0.0
        %563 = vmatprep.subr.mxu0 0.0
        %564 = vmatpush1.msra.mxu0 0.0
        %565 = vmatprep.subr.mxu0 0.0
        %566 = vmatpush1.msra.mxu0 0.0
        %567 = vmatprep.subr.mxu0 0.0
        %568 = vmatpush1.msra.mxu0 0.0
        %569 = vmatprep.subr.mxu0 0.0
        %570 = vmatpush1.msra.mxu0 0.0
        %571 = vmatprep.subr.mxu0 0.0
        %572 = vmatpush1.msra.mxu0 0.0
        %573 = vmatprep.subr.mxu0 0.0
        %574 = vmatpush1.msra.mxu0 0.0
        %575 = vmatprep.subr.mxu0 0.0
        %576 = vmatpush1.msra.mxu0 0.0
        %577 = vmatprep.subr.mxu0 0.0
        %578 = vmatpush1.msra.mxu0 0.0
        %579 = vmatprep.subr.mxu0 0.0
        %580 = vmatpush1.msra.mxu0 0.0
        %581 = vmatprep.subr.mxu0 0.0
        %582 = vmatpush1.msra.mxu0 0.0
        %583 = vmatprep.mubr.f32.mxu0 0.0
        %584 = vmatmul.mubr.f32.gmra.mrb[0].mxu0 %v510
        %v585 = vpop.f32.mrb[0].mxu0
        %v586 = vadd.f32 0.0, %v585
        %v587 = vpop.f32.mrb[0].mxu0
        %588 = vmatprep.mubr.f32.mxu0 0.0
        %589 = vmatmul.mubr.f32.gmra.mrb[0].mxu0 %v513
        %v590 = vpop.f32.mrb[0].mxu0
        %v591 = vadd.f32 0.0, %v590
        %v592 = vpop.f32.mrb[0].mxu0
        %593 = vdwg.mxu0
        %v595 = vsel %vm423, %v504, 0
        %v598 = vsel %vm423, %v505, 0
        %600 = vmatprep.subr.mxu0 0.0
        %601 = vmatpush1.msra.mxu0 %v420
        %602 = vmatprep.subr.mxu0 0.0
        %603 = vmatpush1.msra.mxu0 %v421
        %604 = vmatprep.subr.mxu0 0.0
        %605 = vmatpush1.msra.mxu0 0.0
        %606 = vmatprep.subr.mxu0 0.0
        %607 = vmatpush1.msra.mxu0 0.0
        %608 = vmatprep.subr.mxu0 0.0
        %609 = vmatpush1.msra.mxu0 0.0
        %610 = vmatprep.subr.mxu0 0.0
        %611 = vmatpush1.msra.mxu0 0.0
        %612 = vmatprep.subr.mxu0 0.0
        %613 = vmatpush1.msra.mxu0 0.0
        %614 = vmatprep.subr.mxu0 0.0
        %615 = vmatpush1.msra.mxu0 0.0
        %616 = vmatprep.subr.mxu0 0.0
        %617 = vmatpush1.msra.mxu0 0.0
        %618 = vmatprep.subr.mxu0 0.0
        %619 = vmatpush1.msra.mxu0 0.0
        %620 = vmatprep.subr.mxu0 0.0
        %621 = vmatpush1.msra.mxu0 0.0
        %622 = vmatprep.subr.mxu0 0.0
        %623 = vmatpush1.msra.mxu0 0.0
        %624 = vmatprep.subr.mxu0 0.0
        %625 = vmatpush1.msra.mxu0 0.0
        %626 = vmatprep.subr.mxu0 0.0
        %627 = vmatpush1.msra.mxu0 0.0
        %628 = vmatprep.subr.mxu0 0.0
        %629 = vmatpush1.msra.mxu0 0.0
        %630 = vmatprep.subr.mxu0 0.0
        %631 = vmatpush1.msra.mxu0 0.0
        %632 = vmatprep.subr.mxu0 0.0
        %633 = vmatpush1.msra.mxu0 0.0
        %634 = vmatprep.subr.mxu0 0.0
        %635 = vmatpush1.msra.mxu0 0.0
        %636 = vmatprep.subr.mxu0 0.0
        %637 = vmatpush1.msra.mxu0 0.0
        %638 = vmatprep.subr.mxu0 0.0
        %639 = vmatpush1.msra.mxu0 0.0
        %640 = vmatprep.subr.mxu0 0.0
        %641 = vmatpush1.msra.mxu0 0.0
        %642 = vmatprep.subr.mxu0 0.0
        %643 = vmatpush1.msra.mxu0 0.0
        %644 = vmatprep.subr.mxu0 0.0
        %645 = vmatpush1.msra.mxu0 0.0
        %646 = vmatprep.subr.mxu0 0.0
        %647 = vmatpush1.msra.mxu0 0.0
        %648 = vmatprep.subr.mxu0 0.0
        %649 = vmatpush1.msra.mxu0 0.0
        %650 = vmatprep.subr.mxu0 0.0
        %651 = vmatpush1.msra.mxu0 0.0
        %652 = vmatprep.subr.mxu0 0.0
        %653 = vmatpush1.msra.mxu0 0.0
        %654 = vmatprep.subr.mxu0 0.0
        %655 = vmatpush1.msra.mxu0 0.0
        %656 = vmatprep.subr.mxu0 0.0
        %657 = vmatpush1.msra.mxu0 0.0
        %658 = vmatprep.subr.mxu0 0.0
        %659 = vmatpush1.msra.mxu0 0.0
        %660 = vmatprep.subr.mxu0 0.0
        %661 = vmatpush1.msra.mxu0 0.0
        %662 = vmatprep.subr.mxu0 0.0
        %663 = vmatpush1.msra.mxu0 0.0
        %664 = vmatprep.mubr.f32.mxu0 0.0
        %665 = vmatmul.mubr.f32.gmra.mrb[0].mxu0 %v595
        %v666 = vpop.f32.mrb[0].mxu0
        %v667 = vadd.f32 %v586, %v666
        %v668 = vpop.f32.mrb[0].mxu0
        %669 = vmatprep.mubr.f32.mxu0 0.0
        %670 = vmatmul.mubr.f32.gmra.mrb[0].mxu0 %v598
        %v671 = vpop.f32.mrb[0].mxu0
        %v672 = vadd.f32 %v591, %v671
        %v673 = vpop.f32.mrb[0].mxu0
        %674 = vdwg.mxu0
        %v675 = vld [vmem:[%s5] sm:$0xff]
        %v676 = vld [vmem:[%s5 + $0x8] sm:$0xff]
        %678 = vset.pattern.permute.xlu0 0
        %679 = vperm.xlu0 %678, %v675
        %v680 = vpop.permute.xlu0 %679
        %683 = vset.pattern.permute.xlu0 0
        %684 = vperm.xlu0 %683, %v676
        %v685 = vpop.permute.xlu0 %684
        %v687 = vadd.f32 %v667, %v680
        %v688 = vadd.f32 %v672, %v685
        %v689 = vmax.f32 %v687, 0.0
        %v690 = vmax.f32 %v688, 0.0
        %v691 = vld [vmem:[%s6] sm:$0xff]
        %v692 = vld [vmem:[%s6 + $0x8] sm:$0xff]
        %v693 = vld [vmem:[%s7] sm:$0xff]
        %v694 = vld [vmem:[%s7 + $0x8] sm:$0xff]
        %696 = vset.pattern.permute.xlu0 0
        %697 = vperm.xlu0 %696, %v693
        %v698 = vpop.permute.xlu0 %697
        %701 = vset.pattern.permute.xlu0 0
        %702 = vperm.xlu0 %701, %v694
        %v703 = vpop.permute.xlu0 %702
        %v706 = vsel %vm423, %v691, 0
        %v709 = vsel %vm423, %v692, 0
        %711 = vmatprep.subr.mxu0 0.0
        %712 = vmatpush1.msra.mxu0 %v689
        %713 = vmatprep.subr.mxu0 0.0
        %714 = vmatpush1.msra.mxu0 %v690
        %715 = vmatprep.subr.mxu0 0.0
        %716 = vmatpush1.msra.mxu0 0.0
        %717 = vmatprep.subr.mxu0 0.0
        %718 = vmatpush1.msra.mxu0 0.0
        %719 = vmatprep.subr.mxu0 0.0
        %720 = vmatpush1.msra.mxu0 0.0
        %721 = vmatprep.subr.mxu0 0.0
        %722 = vmatpush1.msra.mxu0 0.0
        %723 = vmatprep.subr.mxu0 0.0
        %724 = vmatpush1.msra.mxu0 0.0
        %725 = vmatprep.subr.mxu0 0.0
        %726 = vmatpush1.msra.mxu0 0.0
        %727 = vmatprep.subr.mxu0 0.0
        %728 = vmatpush1.msra.mxu0 0.0
        %729 = vmatprep.subr.mxu0 0.0
        %730 = vmatpush1.msra.mxu0 0.0
        %731 = vmatprep.subr.mxu0 0.0
        %732 = vmatpush1.msra.mxu0 0.0
        %733 = vmatprep.subr.mxu0 0.0
        %734 = vmatpush1.msra.mxu0 0.0
        %735 = vmatprep.subr.mxu0 0.0
        %736 = vmatpush1.msra.mxu0 0.0
        %737 = vmatprep.subr.mxu0 0.0
        %738 = vmatpush1.msra.mxu0 0.0
        %739 = vmatprep.subr.mxu0 0.0
        %740 = vmatpush1.msra.mxu0 0.0
        %741 = vmatprep.subr.mxu0 0.0
        %742 = vmatpush1.msra.mxu0 0.0
        %743 = vmatprep.subr.mxu0 0.0
        %744 = vmatpush1.msra.mxu0 0.0
        %745 = vmatprep.subr.mxu0 0.0
        %746 = vmatpush1.msra.mxu0 0.0
        %747 = vmatprep.subr.mxu0 0.0
        %748 = vmatpush1.msra.mxu0 0.0
        %749 = vmatprep.subr.mxu0 0.0
        %750 = vmatpush1.msra.mxu0 0.0
        %751 = vmatprep.subr.mxu0 0.0
        %752 = vmatpush1.msra.mxu0 0.0
        %753 = vmatprep.subr.mxu0 0.0
        %754 = vmatpush1.msra.mxu0 0.0
        %755 = vmatprep.subr.mxu0 0.0
        %756 = vmatpush1.msra.mxu0 0.0
        %757 = vmatprep.subr.mxu0 0.0
        %758 = vmatpush1.msra.mxu0 0.0
        %759 = vmatprep.subr.mxu0 0.0
        %760 = vmatpush1.msra.mxu0 0.0
        %761 = vmatprep.subr.mxu0 0.0
        %762 = vmatpush1.msra.mxu0 0.0
        %763 = vmatprep.subr.mxu0 0.0
        %764 = vmatpush1.msra.mxu0 0.0
        %765 = vmatprep.subr.mxu0 0.0
        %766 = vmatpush1.msra.mxu0 0.0
        %767 = vmatprep.subr.mxu0 0.0
        %768 = vmatpush1.msra.mxu0 0.0
        %769 = vmatprep.subr.mxu0 0.0
        %770 = vmatpush1.msra.mxu0 0.0
        %771 = vmatprep.subr.mxu0 0.0
        %772 = vmatpush1.msra.mxu0 0.0
        %773 = vmatprep.subr.mxu0 0.0
        %774 = vmatpush1.msra.mxu0 0.0
        %775 = vmatprep.mubr.f32.mxu0 0.0
        %776 = vmatmul.mubr.f32.gmra.mrb[0].mxu0 %v706
        %v777 = vpop.f32.mrb[0].mxu0
        %v778 = vadd.f32 %v698, %v777
        %v779 = vpop.f32.mrb[0].mxu0
        %780 = vmatprep.mubr.f32.mxu0 0.0
        %781 = vmatmul.mubr.f32.gmra.mrb[0].mxu0 %v709
        %v782 = vpop.f32.mrb[0].mxu0
        %v783 = vadd.f32 %v703, %v782
        %v784 = vpop.f32.mrb[0].mxu0
        %785 = vdwg.mxu0
        %v786 = vadd.f32 %v778, %v420
        %v787 = vadd.f32 %v783, %v421
        %v788 = vld [vmem:[%s419] sm:$0xff]
        %v789 = vld [vmem:[%s419 + $0x8] sm:$0xff]
        %791 = vset.pattern.permute.xlu0 0
        %792 = vperm.xlu0 %791, %v788
        %v793 = vpop.permute.xlu0 %792
        %796 = vset.pattern.permute.xlu0 0
        %797 = vperm.xlu0 %796, %v789
        %v798 = vpop.permute.xlu0 %797
        %v800 = vmul.f32 %v786, %v793
        %v801 = vmul.f32 %v787, %v798
        %802 = vst [vmem:[%s410] sm:$0xff] %v800
        %803 = vst [vmem:[%s410 + $0x8] sm:$0xff] %v801
        %s804 = sand.u32 %s248, 1
        %s805 = sand.u32 %s248, 1
        %s806 = smul.addr %s805, 16
        %s807 = scalar_lea.vmem [#allocation3], %s806
        // Predicated region
        $region95: #{attention_forward.5} parent=89 // pred_check
          %p808 = pneg %p258
        $region96: #{attention_forward.5} parent=89 // pred_check_branch
          %810 = sbr.rel (%p808) target = $region98
        $region97: #{attention_forward.5} parent=89 // pred_region
          %s811 = smul.addr %s24, 4
          %s812 = sadd.s32 %s25, %s811
          %s813 = smul.addr %s812, 8
          %s814 = scalar_lea.vmem %s9, %s813
          // Predicated region
          $region99: #{attention_forward.5} parent=97 // pred_check
            _
          $region100: #{attention_forward.5} parent=97 // pred_check_branch
            %816 = sbr.rel (0) target = $region102
          $region101: #{attention_forward.5} parent=97 // pred_region
            // Predicated region
            $region103: #{attention_forward.5} parent=101 // pred_check
              _
            $region104: #{attention_forward.5} parent=101 // pred_check_branch
              %818 = sbr.rel (0) target = $region106
            $region105: #{attention_forward.5} parent=101 // pred_region
              // Predicated region
              $region118: #{attention_forward.5} parent=105 // pred_check
                _
              $region119: #{attention_forward.5} parent=105 // pred_check_branch
                %835 = sbr.rel (0) target = $region121
              $region120: #{attention_forward.5} parent=105 // pred_region
                loop: start=0, step=1, limit=1
                $region122: #{attention_forward.5} parent=120 // loop_pre_header
                  _
                $region123: #{attention_forward.5} parent=120 // loop_header
                  %s837 = sphi 0, %s841
                  %p838 = scmp.ge.s32.totalorder %s837, 1
                  %s842 = sphi %s807, %s807
                  %s843 = sphi %s814, %s814
                $region124: #{attention_forward.5} parent=120 // loop_header_branch
                  %840 = sbr.rel (%p838) target = $region128
                $region125: #{attention_forward.5} parent=120 // loop_body
                  %v844 = vld [vmem:[%s842] sm:$0xff]
                  %845 = vst [vmem:[%s843] sm:$0xff] %v844
                  %v846 = vld [vmem:[%s842 + $0x8] sm:$0xff]
                  %847 = vst [vmem:[%s843 + $0x10] sm:$0xff] %v846
                $region126: #{attention_forward.5} parent=120 // loop_footer
                  %s841 = sadd.s32 1, %s837
                $region127: #{attention_forward.5} parent=120 // loop_footer_branch
                  %836 = sbr.rel target = $region123
                $region128: #{attention_forward.5} parent=120 // loop_exit
                  _
              $region121: #{attention_forward.5} parent=105 // pred_fallthru
                _
              // Predicated region
              $region129: #{attention_forward.5} parent=105 // pred_check
                _
              $region130: #{attention_forward.5} parent=105 // pred_check_branch
                %849 = sbr.rel target = $region132
              $region131: #{attention_forward.5} parent=105 // pred_region
                _
              $region132: #{attention_forward.5} parent=105 // pred_fallthru
                _
            $region106: #{attention_forward.5} parent=101 // pred_fallthru
              _
            // Predicated region
            $region107: #{attention_forward.5} parent=101 // pred_check
              _
            $region108: #{attention_forward.5} parent=101 // pred_check_branch
              %820 = sbr.rel target = $region110
            $region109: #{attention_forward.5} parent=101 // pred_region
              loop: start=0, step=1, limit=1
              $region111: #{attention_forward.5} parent=109 // loop_pre_header
                _
              $region112: #{attention_forward.5} parent=109 // loop_header
                %s823 = sphi 0, %s827
                %p824 = scmp.ge.s32.totalorder %s823, 1
                %s828 = sphi %s807, %s807
                %s829 = sphi %s814, %s814
              $region113: #{attention_forward.5} parent=109 // loop_header_branch
                %826 = sbr.rel (%p824) target = $region117
              $region114: #{attention_forward.5} parent=109 // loop_body
                %v830 = vld [vmem:[%s828] sm:$0xff]
                %831 = vst [vmem:[%s829] sm:$0xff] %v830
                %v832 = vld [vmem:[%s828 + $0x8] sm:$0xff]
                %833 = vst [vmem:[%s829 + $0x10] sm:$0xff] %v832
              $region115: #{attention_forward.5} parent=109 // loop_footer
                %s827 = sadd.s32 1, %s823
              $region116: #{attention_forward.5} parent=109 // loop_footer_branch
                %822 = sbr.rel target = $region112
              $region117: #{attention_forward.5} parent=109 // loop_exit
                _
            $region110: #{attention_forward.5} parent=101 // pred_fallthru
              _
          $region102: #{attention_forward.5} parent=97 // pred_fallthru
            _
          %850 = vnop
        $region98: #{attention_forward.5} parent=89 // pred_fallthru
          _
      $region90: #{attention_forward.5} parent=5 // pred_fallthru
        _
      %p851 = scmp.le.s32.totalorder 2, %s15
      // Predicated region
      $region133: #{attention_forward.5} parent=5 // pred_check
        %p852 = pneg %p851
      $region134: #{attention_forward.5} parent=5 // pred_check_branch
        %854 = sbr.rel (%p852) target = $region136
      $region135: #{attention_forward.5} parent=5 // pred_region
        %s855 = ssub.s32 %s15, 2
        // Predicated region
        $region137: #{attention_forward.5} parent=135 // pred_check
          %p856 = pneg %p264
        $region138: #{attention_forward.5} parent=135 // pred_check_branch
          %858 = sbr.rel (%p856) target = $region140
        $region139: #{attention_forward.5} parent=135 // pred_region
          %s859 = sand.u32 %s249, 1
          %s860 = sand.u32 %s249, 1
          %s861 = smul.addr %s860, 16
          %s862 = scalar_lea.vmem [#allocation3], %s861
        $region140: #{attention_forward.5} parent=135 // pred_fallthru
          _
      $region136: #{attention_forward.5} parent=5 // pred_fallthru
        _
    $region6: #{attention_forward.5} parent=1 // loop_footer
      %s19 = sadd.s32 1, %s15
    $region7: #{attention_forward.5} parent=1 // loop_footer_branch
      %14 = sbr.rel target = $region3
    $region8: #{attention_forward.5} parent=1 // loop_exit
      _

</llo_original>
